<compile_context>
chip_gen: v7x
topology: tpu7x:2x2x1
jax: 0.10.0
libtpu: 0.0.40
codegen_flags: <defaults>
</compile_context>

<pallas_src>
import functools

import jax
import jax.numpy as jnp
from jax.experimental import pallas as pl
from jax.experimental.pallas import tpu as pltpu


def _layernorm(x, gamma, beta, eps=1e-5):
    mu = jnp.mean(x, axis=-1, keepdims=True)
    var = jnp.mean((x - mu) ** 2, axis=-1, keepdims=True)
    return (x - mu) * jax.lax.rsqrt(var + eps) * gamma + beta


def decoder_layer_kernel(
    x_ref,
    wq_ref, bq_ref, wk_ref, bk_ref, wv_ref, bv_ref, wo_ref, bo_ref,
    g1_ref, be1_ref,
    w1_ref, bf1_ref, w2_ref, bf2_ref,
    g2_ref, be2_ref,
    out_ref, attn_ref,
    *, nhead, q_tile, compute_dtype, approx_softmax,
):
    # Grid = (batch, query-tile). x block is the full (1, S, D) row block per batch;
    # we slice the current query tile out of it (K/V need all S rows).
    x_kv = x_ref[0]                                             # (S, D) f32
    S, D = x_kv.shape
    dh = D // nhead
    scale = jnp.float32(1.0 / (dh ** 0.5))

    q_start = pl.multiple_of(pl.program_id(1) * q_tile, q_tile)
    xq = x_ref[0, pl.ds(q_start, q_tile), :]                    # (TQ, D) f32

    xq_c = xq.astype(compute_dtype)
    xkv_c = x_kv.astype(compute_dtype)

    # --- fused Q/K/V projections (full-D contraction, lane-dense outputs) -------
    q = jnp.dot(xq_c, wq_ref[...], preferred_element_type=jnp.float32) + bq_ref[...]
    k = jnp.dot(xkv_c, wk_ref[...], preferred_element_type=jnp.float32) + bk_ref[...]
    v = jnp.dot(xkv_c, wv_ref[...], preferred_element_type=jnp.float32) + bv_ref[...]

    # --- head-batched attention (scale folded into q: TQ*D mults, not H*TQ*S) ---
    qh = (q * scale).astype(compute_dtype).reshape(q_tile, nhead, dh).transpose(1, 0, 2)
    kh = k.astype(compute_dtype).reshape(S, nhead, dh).transpose(1, 0, 2)
    vh = v.astype(compute_dtype).reshape(S, nhead, dh).transpose(1, 0, 2)

    s = jnp.einsum("hqd,hkd->hqk", qh, kh,
                   preferred_element_type=jnp.float32)          # (H, TQ, S) f32
    m = jnp.max(s, axis=-1, keepdims=True)
    e = jnp.exp(s - m)
    denom = jnp.sum(e, axis=-1, keepdims=True)
    if approx_softmax:
        p = e * pl.reciprocal(denom, approx=True)               # EUP slot, frees VALU
    else:
        p = e / denom

    # one contiguous lane-dense store of the probabilities for this query tile
    attn_ref[0] = p                                             # (H, TQ, S)

    ctx_h = jnp.einsum("hqk,hkd->hqd", p.astype(compute_dtype), vh,
                       preferred_element_type=jnp.float32)      # (H, TQ, dh)
    ctx = ctx_h.transpose(1, 0, 2).reshape(q_tile, D)           # (TQ, D)

    attn_out = jnp.dot(ctx.astype(compute_dtype), wo_ref[...],
                       preferred_element_type=jnp.float32) + bo_ref[...]

    # residual + norm1 (dropout == identity in eval mode); elementwise kept in f32
    x1 = _layernorm(xq + attn_out, g1_ref[...], be1_ref[...])

    # --- feed-forward: Linear -> SiLU -> Linear ----------------------------------
    h1 = jnp.dot(x1.astype(compute_dtype), w1_ref[...],
                 preferred_element_type=jnp.float32) + bf1_ref[...]
    h1 = h1 * jax.nn.sigmoid(h1)                                # SiLU
    ff = jnp.dot(h1.astype(compute_dtype), w2_ref[...],
                 preferred_element_type=jnp.float32) + bf2_ref[...]

    # residual + norm2
    out_ref[0] = _layernorm(x1 + ff, g2_ref[...], be2_ref[...])


_PARAM_ORDER = [
    "wq", "bq", "wk", "bk", "wv", "bv", "wo", "bo",
    "g1", "be1",
    "w1", "bf1", "w2", "bf2",
    "g2", "be2",
]
_MATMUL_WEIGHTS = {"wq", "wk", "wv", "wo", "w1", "w2"}


def decoder_layer(x, params, nhead, *, compute_dtype=jnp.float32,
                  approx_softmax=None, q_tile=None):
    B, S, D = x.shape
    assert D % nhead == 0

    if q_tile is None:
        # largest convenient query tile: 128 if it divides S, else the full S
        q_tile = 128 if (S % 128 == 0) else S
    assert S % q_tile == 0
    num_q = S // q_tile

    if approx_softmax is None:
        approx_softmax = compute_dtype != jnp.float32

    # Cast only the MXU weight operands; biases / LN params stay f32.
    # (bf16 weights halve VMEM + DMA bytes and feed the MXU at full rate.)
    args = [p if n not in _MATMUL_WEIGHTS else p.astype(compute_dtype)
            for n, p in ((name, params[name]) for name in _PARAM_ORDER)]

    def full_spec(shape):
        return pl.BlockSpec(shape, lambda b, qi, _n=len(shape): (0,) * _n)

    # x: full (S, D) row block per batch (K/V need all rows); constant across the
    # query-tile axis, so it is only DMA'd when the batch index changes.
    in_specs = [pl.BlockSpec((1, S, D), lambda b, qi: (b, 0, 0))]
    # Weight block index never changes -> fetched once, not re-DMA'd per step.
    # TODO(synk): for very large D/F (v7x 64 MiB VMEM), single-buffer the weights
    #             (pl.Buffered(1)) or tile the FFN contraction as an extra grid axis.
    in_specs += [full_spec(a.shape) for a in args]

    out_specs = [
        pl.BlockSpec((1, q_tile, D), lambda b, qi: (b, qi, 0)),
        pl.BlockSpec((1, nhead, q_tile, S), lambda b, qi: (b, 0, qi, 0)),
    ]
    out_shape = [
        jax.ShapeDtypeStruct((B, S, D), jnp.float32),
        jax.ShapeDtypeStruct((B, nhead, S, S), jnp.float32),
    ]

    kernel = functools.partial(
        decoder_layer_kernel,
        nhead=nhead, q_tile=q_tile,
        compute_dtype=compute_dtype, approx_softmax=approx_softmax,
    )

    return pl.pallas_call(
        kernel,
        out_shape=out_shape,
        grid_spec=pltpu.PrefetchScalarGridSpec(
            num_scalar_prefetch=0,
            grid=(B, num_q),
            in_specs=in_specs,
            out_specs=out_specs,
        ),
        compiler_params=pltpu.CompilerParams(
            # both axes independent -> megacore sharding on v7x, pipelining everywhere
            dimension_semantics=("parallel", "parallel"),
            # safe on all generations: > default scoped limit, < v7x 64 MiB physical
            vmem_limit_bytes=48 * 1024 * 1024,
        ),
    )(x, *args)


def _reference(x, params, nhead):
    """Pure-JAX reference mirroring the kernel math (eval-mode dropout)."""
    B, S, D = x.shape
    dh = D // nhead
    q = x @ params["wq"] + params["bq"]
    k = x @ params["wk"] + params["bk"]
    v = x @ params["wv"] + params["bv"]
    qh = q.reshape(B, S, nhead, dh).transpose(0, 2, 1, 3)
    kh = k.reshape(B, S, nhead, dh).transpose(0, 2, 1, 3)
    vh = v.reshape(B, S, nhead, dh).transpose(0, 2, 1, 3)
    s = jnp.einsum("bhqd,bhkd->bhqk", qh, kh) / jnp.sqrt(jnp.float32(dh))
    p = jax.nn.softmax(s, axis=-1)
    ctx = jnp.einsum("bhqk,bhkd->bhqd", p, vh).transpose(0, 2, 1, 3).reshape(B, S, D)
    attn_out = ctx @ params["wo"] + params["bo"]

    def ln(z, g, b):
        mu = jnp.mean(z, axis=-1, keepdims=True)
        var = jnp.mean((z - mu) ** 2, axis=-1, keepdims=True)
        return (z - mu) * jax.lax.rsqrt(var + 1e-5) * g + b

    x1 = ln(x + attn_out, params["g1"], params["be1"])
    h1 = x1 @ params["w1"] + params["bf1"]
    h1 = h1 * jax.nn.sigmoid(h1)
    ff = h1 @ params["w2"] + params["bf2"]
    x2 = ln(x1 + ff, params["g2"], params["be2"])
    return x2, p


def init_params(key, d_model, nhead, dim_feedforward):
    keys = jax.random.split(key, 10)
    scale = 0.05

    def w(k, shape):
        return scale * jax.random.normal(k, shape, dtype=jnp.float32)

    params = {
        "wq": w(keys[0], (d_model, d_model)), "bq": jnp.zeros((1, d_model), jnp.float32),
        "wk": w(keys[1], (d_model, d_model)), "bk": jnp.zeros((1, d_model), jnp.float32),
        "wv": w(keys[2], (d_model, d_model)), "bv": jnp.zeros((1, d_model), jnp.float32),
        "wo": w(keys[3], (d_model, d_model)), "bo": jnp.zeros((1, d_model), jnp.float32),
        "g1": jnp.ones((1, d_model), jnp.float32), "be1": jnp.zeros((1, d_model), jnp.float32),
        "w1": w(keys[4], (d_model, dim_feedforward)),
        "bf1": jnp.zeros((1, dim_feedforward), jnp.float32),
        "w2": w(keys[5], (dim_feedforward, d_model)),
        "bf2": jnp.zeros((1, d_model), jnp.float32),
        "g2": jnp.ones((1, d_model), jnp.float32), "be2": jnp.zeros((1, d_model), jnp.float32),
    }
    return params


if __name__ == "__main__":
    B, S, D, H, F = 2, 8, 32, 4, 64   # batch, seq, d_model, nhead, dim_feedforward

    key = jax.random.PRNGKey(0)
    kx, kp = jax.random.split(key)
    x = jax.random.normal(kx, (B, S, D), dtype=jnp.float32)
    params = init_params(kp, D, H, F)

    ref_out, ref_attn = _reference(x, params, H)

    # exact path: f32 MXU operands, exact softmax divide — tight tolerance
    out, attn_info = decoder_layer(x, params, H, compute_dtype=jnp.float32)
    out = jax.block_until_ready(out)
    attn_info = jax.block_until_ready(attn_info)
    assert jnp.allclose(out, ref_out, atol=1e-4, rtol=1e-4)
    assert jnp.allclose(attn_info, ref_attn, atol=1e-4, rtol=1e-4)

    # perf configuration: bf16 MXU operands + approx softmax reciprocal — loose tolerance
    out_bf, attn_bf = decoder_layer(x, params, H, compute_dtype=jnp.bfloat16)
    out_bf = jax.block_until_ready(out_bf)
    attn_bf = jax.block_until_ready(attn_bf)
    assert jnp.allclose(out_bf, ref_out, atol=5e-2, rtol=5e-2)
    assert jnp.allclose(attn_bf, ref_attn, atol=5e-2, rtol=5e-2)

    print("KERNEL_OK")
</pallas_src>

<mosaic_0001>
module attributes {stable_mosaic.version = 11 : i64} {
  func.func @decoder_layer_kernel(%arg0: i32, %arg1: i32, %arg2: memref<1x8x32xf32, #tpu.memory_space<vmem>>, %arg3: memref<32x32xf32, #tpu.memory_space<vmem>>, %arg4: memref<1x32xf32, #tpu.memory_space<vmem>>, %arg5: memref<32x32xf32, #tpu.memory_space<vmem>>, %arg6: memref<1x32xf32, #tpu.memory_space<vmem>>, %arg7: memref<32x32xf32, #tpu.memory_space<vmem>>, %arg8: memref<1x32xf32, #tpu.memory_space<vmem>>, %arg9: memref<32x32xf32, #tpu.memory_space<vmem>>, %arg10: memref<1x32xf32, #tpu.memory_space<vmem>>, %arg11: memref<1x32xf32, #tpu.memory_space<vmem>>, %arg12: memref<1x32xf32, #tpu.memory_space<vmem>>, %arg13: memref<32x64xf32, #tpu.memory_space<vmem>>, %arg14: memref<1x64xf32, #tpu.memory_space<vmem>>, %arg15: memref<64x32xf32, #tpu.memory_space<vmem>>, %arg16: memref<1x32xf32, #tpu.memory_space<vmem>>, %arg17: memref<1x32xf32, #tpu.memory_space<vmem>>, %arg18: memref<1x32xf32, #tpu.memory_space<vmem>>, %arg19: memref<1x8x32xf32, #tpu.memory_space<vmem>>, %arg20: memref<1x4x8x8xf32, #tpu.memory_space<vmem>>) attributes {dimension_semantics = [#tpu.dimension_semantics<parallel>, #tpu.dimension_semantics<parallel>], iteration_bounds = array<i64: 2, 1>, scalar_prefetch = 0 : i64, scratch_operands = 0 : i64, tpu.core_type = #tpu.core_type<tc>, window_params = [{transform_indices = @transform_0, window_bounds = array<i64: 1, 8, 32>}, {pipeline_mode = #tpu.pipeline_mode<synchronous>, transform_indices = @transform_1, window_bounds = array<i64: 32, 32>}, {pipeline_mode = #tpu.pipeline_mode<synchronous>, transform_indices = @transform_2, window_bounds = array<i64: 1, 32>}, {pipeline_mode = #tpu.pipeline_mode<synchronous>, transform_indices = @transform_3, window_bounds = array<i64: 32, 32>}, {pipeline_mode = #tpu.pipeline_mode<synchronous>, transform_indices = @transform_4, window_bounds = array<i64: 1, 32>}, {pipeline_mode = #tpu.pipeline_mode<synchronous>, transform_indices = @transform_5, window_bounds = array<i64: 32, 32>}, {pipeline_mode = #tpu.pipeline_mode<synchronous>, transform_indices = @transform_6, window_bounds = array<i64: 1, 32>}, {pipeline_mode = #tpu.pipeline_mode<synchronous>, transform_indices = @transform_7, window_bounds = array<i64: 32, 32>}, {pipeline_mode = #tpu.pipeline_mode<synchronous>, transform_indices = @transform_8, window_bounds = array<i64: 1, 32>}, {pipeline_mode = #tpu.pipeline_mode<synchronous>, transform_indices = @transform_9, window_bounds = array<i64: 1, 32>}, {pipeline_mode = #tpu.pipeline_mode<synchronous>, transform_indices = @transform_10, window_bounds = array<i64: 1, 32>}, {pipeline_mode = #tpu.pipeline_mode<synchronous>, transform_indices = @transform_11, window_bounds = array<i64: 32, 64>}, {pipeline_mode = #tpu.pipeline_mode<synchronous>, transform_indices = @transform_12, window_bounds = array<i64: 1, 64>}, {pipeline_mode = #tpu.pipeline_mode<synchronous>, transform_indices = @transform_13, window_bounds = array<i64: 64, 32>}, {pipeline_mode = #tpu.pipeline_mode<synchronous>, transform_indices = @transform_14, window_bounds = array<i64: 1, 32>}, {pipeline_mode = #tpu.pipeline_mode<synchronous>, transform_indices = @transform_15, window_bounds = array<i64: 1, 32>}, {pipeline_mode = #tpu.pipeline_mode<synchronous>, transform_indices = @transform_16, window_bounds = array<i64: 1, 32>}, {transform_indices = @transform_17, window_bounds = array<i64: 1, 8, 32>}, {transform_indices = @transform_18, window_bounds = array<i64: 1, 4, 8, 8>}]} {
    %c0 = arith.constant 0 : index
    %c0_0 = arith.constant 0 : index
    %c0_1 = arith.constant 0 : index
    %0 = vector.load %arg2[%c0, %c0_0, %c0_1] : memref<1x8x32xf32, #tpu.memory_space<vmem>>, vector<1x8x32xf32>
    %1 = vector.shape_cast %0 : vector<1x8x32xf32> to vector<8x32xf32>
    %c8_i32 = arith.constant 8 : i32
    %2 = arith.muli %arg1, %c8_i32 : i32
    %3 = tpu.assume_multiple %2, 8 : i32
    %c0_2 = arith.constant 0 : index
    %4 = arith.index_cast %3 : i32 to index
    %c0_3 = arith.constant 0 : index
    %5 = vector.load %arg2[%c0_2, %4, %c0_3] : memref<1x8x32xf32, #tpu.memory_space<vmem>>, vector<1x8x32xf32>
    %6 = vector.shape_cast %5 : vector<1x8x32xf32> to vector<8x32xf32>
    %c0_4 = arith.constant 0 : index
    %c0_5 = arith.constant 0 : index
    %7 = vector.load %arg3[%c0_4, %c0_5] : memref<32x32xf32, #tpu.memory_space<vmem>>, vector<32x32xf32>
    %cst = arith.constant dense<0.000000e+00> : vector<8x32xf32>
    %8 = tpu.matmul %6, %7, %cst {dimension_numbers = #tpu.dot_dimension_numbers<[1], [0], [0], [1], [0, 0, 1, 1], [], []>} : vector<8x32xf32>, vector<32x32xf32>, vector<8x32xf32> -> vector<8x32xf32>
    %c0_6 = arith.constant 0 : index
    %c0_7 = arith.constant 0 : index
    %9 = vector.load %arg4[%c0_6, %c0_7] : memref<1x32xf32, #tpu.memory_space<vmem>>, vector<1x32xf32>
    %10 = vector.broadcast %9 : vector<1x32xf32> to vector<8x32xf32>
    %11 = arith.addf %8, %10 : vector<8x32xf32>
    %c0_8 = arith.constant 0 : index
    %c0_9 = arith.constant 0 : index
    %12 = vector.load %arg5[%c0_8, %c0_9] : memref<32x32xf32, #tpu.memory_space<vmem>>, vector<32x32xf32>
    %cst_10 = arith.constant dense<0.000000e+00> : vector<8x32xf32>
    %13 = tpu.matmul %1, %12, %cst_10 {dimension_numbers = #tpu.dot_dimension_numbers<[1], [0], [0], [1], [0, 0, 1, 1], [], []>} : vector<8x32xf32>, vector<32x32xf32>, vector<8x32xf32> -> vector<8x32xf32>
    %c0_11 = arith.constant 0 : index
    %c0_12 = arith.constant 0 : index
    %14 = vector.load %arg6[%c0_11, %c0_12] : memref<1x32xf32, #tpu.memory_space<vmem>>, vector<1x32xf32>
    %15 = vector.broadcast %14 : vector<1x32xf32> to vector<8x32xf32>
    %16 = arith.addf %13, %15 : vector<8x32xf32>
    %c0_13 = arith.constant 0 : index
    %c0_14 = arith.constant 0 : index
    %17 = vector.load %arg7[%c0_13, %c0_14] : memref<32x32xf32, #tpu.memory_space<vmem>>, vector<32x32xf32>
    %cst_15 = arith.constant dense<0.000000e+00> : vector<8x32xf32>
    %18 = tpu.matmul %1, %17, %cst_15 {dimension_numbers = #tpu.dot_dimension_numbers<[1], [0], [0], [1], [0, 0, 1, 1], [], []>} : vector<8x32xf32>, vector<32x32xf32>, vector<8x32xf32> -> vector<8x32xf32>
    %c0_16 = arith.constant 0 : index
    %c0_17 = arith.constant 0 : index
    %19 = vector.load %arg8[%c0_16, %c0_17] : memref<1x32xf32, #tpu.memory_space<vmem>>, vector<1x32xf32>
    %20 = vector.broadcast %19 : vector<1x32xf32> to vector<8x32xf32>
    %21 = arith.addf %18, %20 : vector<8x32xf32>
    %cst_18 = arith.constant 0.353553385 : f32
    %22 = vector.broadcast %cst_18 : f32 to vector<8x32xf32>
    %23 = arith.mulf %11, %22 : vector<8x32xf32>
    %24 = vector.shape_cast %23 : vector<8x32xf32> to vector<8x4x8xf32>
    %25 = tpu.transpose %24, [1, 0, 2] : vector<8x4x8xf32> -> vector<4x8x8xf32>
    %26 = vector.shape_cast %16 : vector<8x32xf32> to vector<8x4x8xf32>
    %27 = tpu.transpose %26, [1, 0, 2] : vector<8x4x8xf32> -> vector<4x8x8xf32>
    %28 = vector.shape_cast %21 : vector<8x32xf32> to vector<8x4x8xf32>
    %29 = tpu.transpose %28, [1, 0, 2] : vector<8x4x8xf32> -> vector<4x8x8xf32>
    "tpu.trace_start"() <{level = 10 : i32, message = "hqd,hkd->hqk"}> : () -> ()
    %cst_19 = arith.constant dense<0.000000e+00> : vector<4x8x8xf32>
    %30 = tpu.matmul %25, %27, %cst_19 {dimension_numbers = #tpu.dot_dimension_numbers<[2], [2], [1], [1], [0, 0, 0, 1, 1, 1], [0], [0]>} : vector<4x8x8xf32>, vector<4x8x8xf32>, vector<4x8x8xf32> -> vector<4x8x8xf32>
    "tpu.trace_stop"() : () -> ()
    %cst_20 = arith.constant dense<0xFF800000> : vector<4x8xf32>
    %31 = vector.multi_reduction <maximumf>, %30, %cst_20 [2] : vector<4x8x8xf32> to vector<4x8xf32>
    %32 = vector.shape_cast %31 : vector<4x8xf32> to vector<4x8x1xf32>
    %33 = vector.broadcast %32 : vector<4x8x1xf32> to vector<4x8x8xf32>
    %34 = arith.subf %30, %33 : vector<4x8x8xf32>
    %35 = math.exp %34 : vector<4x8x8xf32>
    %cst_21 = arith.constant dense<0.000000e+00> : vector<4x8xf32>
    %36 = vector.multi_reduction <add>, %35, %cst_21 [2] : vector<4x8x8xf32> to vector<4x8xf32>
    %37 = vector.shape_cast %36 : vector<4x8xf32> to vector<4x8x1xf32>
    %38 = vector.broadcast %37 : vector<4x8x1xf32> to vector<4x8x8xf32>
    %39 = arith.divf %35, %38 : vector<4x8x8xf32>
    %c0_22 = arith.constant 0 : index
    %c0_23 = arith.constant 0 : index
    %c0_24 = arith.constant 0 : index
    %c0_25 = arith.constant 0 : index
    %40 = vector.load %arg20[%c0_22, %c0_23, %c0_24, %c0_25] : memref<1x4x8x8xf32, #tpu.memory_space<vmem>>, vector<1x4x8x8xf32>
    %41 = vector.shape_cast %40 : vector<1x4x8x8xf32> to vector<4x8x8xf32>
    %42 = vector.shape_cast %39 : vector<4x8x8xf32> to vector<1x4x8x8xf32>
    tpu.vector_store %arg20[%c0_22, %c0_23, %c0_24, %c0_25], %42 {strides = array<i32>} : memref<1x4x8x8xf32, #tpu.memory_space<vmem>>, vector<1x4x8x8xf32>,
    "tpu.trace_start"() <{level = 10 : i32, message = "hqk,hkd->hqd"}> : () -> ()
    %cst_26 = arith.constant dense<0.000000e+00> : vector<4x8x8xf32>
    %43 = tpu.matmul %39, %29, %cst_26 {dimension_numbers = #tpu.dot_dimension_numbers<[2], [1], [1], [2], [0, 0, 0, 1, 1, 2], [0], [0]>} : vector<4x8x8xf32>, vector<4x8x8xf32>, vector<4x8x8xf32> -> vector<4x8x8xf32>
    "tpu.trace_stop"() : () -> ()
    %44 = tpu.transpose %43, [1, 0, 2] : vector<4x8x8xf32> -> vector<8x4x8xf32>
    %45 = vector.shape_cast %44 : vector<8x4x8xf32> to vector<8x32xf32>
    %c0_27 = arith.constant 0 : index
    %c0_28 = arith.constant 0 : index
    %46 = vector.load %arg9[%c0_27, %c0_28] : memref<32x32xf32, #tpu.memory_space<vmem>>, vector<32x32xf32>
    %cst_29 = arith.constant dense<0.000000e+00> : vector<8x32xf32>
    %47 = tpu.matmul %45, %46, %cst_29 {dimension_numbers = #tpu.dot_dimension_numbers<[1], [0], [0], [1], [0, 0, 1, 1], [], []>} : vector<8x32xf32>, vector<32x32xf32>, vector<8x32xf32> -> vector<8x32xf32>
    %c0_30 = arith.constant 0 : index
    %c0_31 = arith.constant 0 : index
    %48 = vector.load %arg10[%c0_30, %c0_31] : memref<1x32xf32, #tpu.memory_space<vmem>>, vector<1x32xf32>
    %49 = vector.broadcast %48 : vector<1x32xf32> to vector<8x32xf32>
    %50 = arith.addf %47, %49 : vector<8x32xf32>
    %51 = arith.addf %6, %50 : vector<8x32xf32>
    %c0_32 = arith.constant 0 : index
    %c0_33 = arith.constant 0 : index
    %52 = vector.load %arg11[%c0_32, %c0_33] : memref<1x32xf32, #tpu.memory_space<vmem>>, vector<1x32xf32>
    %c0_34 = arith.constant 0 : index
    %c0_35 = arith.constant 0 : index
    %53 = vector.load %arg12[%c0_34, %c0_35] : memref<1x32xf32, #tpu.memory_space<vmem>>, vector<1x32xf32>
    %cst_36 = arith.constant dense<0.000000e+00> : vector<8xf32>
    %54 = vector.multi_reduction <add>, %51, %cst_36 [1] : vector<8x32xf32> to vector<8xf32>
    %55 = vector.shape_cast %54 : vector<8xf32> to vector<8x1xf32>
    %cst_37 = arith.constant 3.200000e+01 : f32
    %56 = vector.broadcast %cst_37 : f32 to vector<8x1xf32>
    %57 = arith.divf %55, %56 : vector<8x1xf32>
    %58 = vector.broadcast %57 : vector<8x1xf32> to vector<8x32xf32>
    %59 = arith.subf %51, %58 : vector<8x32xf32>
    %60 = arith.mulf %59, %59 : vector<8x32xf32>
    %cst_38 = arith.constant dense<0.000000e+00> : vector<8xf32>
    %61 = vector.multi_reduction <add>, %60, %cst_38 [1] : vector<8x32xf32> to vector<8xf32>
    %62 = vector.shape_cast %61 : vector<8xf32> to vector<8x1xf32>
    %cst_39 = arith.constant 3.200000e+01 : f32
    %63 = vector.broadcast %cst_39 : f32 to vector<8x1xf32>
    %64 = arith.divf %62, %63 : vector<8x1xf32>
    %65 = vector.broadcast %57 : vector<8x1xf32> to vector<8x32xf32>
    %66 = arith.subf %51, %65 : vector<8x32xf32>
    %cst_40 = arith.constant 9.99999974E-6 : f32
    %67 = vector.broadcast %cst_40 : f32 to vector<8x1xf32>
    %68 = arith.addf %64, %67 : vector<8x1xf32>
    %69 = math.rsqrt %68 : vector<8x1xf32>
    %70 = vector.broadcast %69 : vector<8x1xf32> to vector<8x32xf32>
    %71 = arith.mulf %66, %70 : vector<8x32xf32>
    %72 = vector.broadcast %52 : vector<1x32xf32> to vector<8x32xf32>
    %73 = arith.mulf %71, %72 : vector<8x32xf32>
    %74 = vector.broadcast %53 : vector<1x32xf32> to vector<8x32xf32>
    %75 = arith.addf %73, %74 : vector<8x32xf32>
    %c0_41 = arith.constant 0 : index
    %c0_42 = arith.constant 0 : index
    %76 = vector.load %arg13[%c0_41, %c0_42] : memref<32x64xf32, #tpu.memory_space<vmem>>, vector<32x64xf32>
    %cst_43 = arith.constant dense<0.000000e+00> : vector<8x64xf32>
    %77 = tpu.matmul %75, %76, %cst_43 {dimension_numbers = #tpu.dot_dimension_numbers<[1], [0], [0], [1], [0, 0, 1, 1], [], []>} : vector<8x32xf32>, vector<32x64xf32>, vector<8x64xf32> -> vector<8x64xf32>
    %c0_44 = arith.constant 0 : index
    %c0_45 = arith.constant 0 : index
    %78 = vector.load %arg14[%c0_44, %c0_45] : memref<1x64xf32, #tpu.memory_space<vmem>>, vector<1x64xf32>
    %79 = vector.broadcast %78 : vector<1x64xf32> to vector<8x64xf32>
    %80 = arith.addf %77, %79 : vector<8x64xf32>
    %81 = arith.negf %80 : vector<8x64xf32>
    %82 = math.exp %81 : vector<8x64xf32>
    %cst_46 = arith.constant 1.000000e+00 : f32
    %83 = vector.broadcast %cst_46 : f32 to vector<8x64xf32>
    %84 = arith.addf %83, %82 : vector<8x64xf32>
    %85 = arith.divf %83, %84 : vector<8x64xf32>
    %86 = arith.mulf %80, %85 : vector<8x64xf32>
    %c0_47 = arith.constant 0 : index
    %c0_48 = arith.constant 0 : index
    %87 = vector.load %arg15[%c0_47, %c0_48] : memref<64x32xf32, #tpu.memory_space<vmem>>, vector<64x32xf32>
    %cst_49 = arith.constant dense<0.000000e+00> : vector<8x32xf32>
    %88 = tpu.matmul %86, %87, %cst_49 {dimension_numbers = #tpu.dot_dimension_numbers<[1], [0], [0], [1], [0, 0, 1, 1], [], []>} : vector<8x64xf32>, vector<64x32xf32>, vector<8x32xf32> -> vector<8x32xf32>
    %c0_50 = arith.constant 0 : index
    %c0_51 = arith.constant 0 : index
    %89 = vector.load %arg16[%c0_50, %c0_51] : memref<1x32xf32, #tpu.memory_space<vmem>>, vector<1x32xf32>
    %90 = vector.broadcast %89 : vector<1x32xf32> to vector<8x32xf32>
    %91 = arith.addf %88, %90 : vector<8x32xf32>
    %92 = arith.addf %75, %91 : vector<8x32xf32>
    %c0_52 = arith.constant 0 : index
    %c0_53 = arith.constant 0 : index
    %93 = vector.load %arg17[%c0_52, %c0_53] : memref<1x32xf32, #tpu.memory_space<vmem>>, vector<1x32xf32>
    %c0_54 = arith.constant 0 : index
    %c0_55 = arith.constant 0 : index
    %94 = vector.load %arg18[%c0_54, %c0_55] : memref<1x32xf32, #tpu.memory_space<vmem>>, vector<1x32xf32>
    %cst_56 = arith.constant dense<0.000000e+00> : vector<8xf32>
    %95 = vector.multi_reduction <add>, %92, %cst_56 [1] : vector<8x32xf32> to vector<8xf32>
    %96 = vector.shape_cast %95 : vector<8xf32> to vector<8x1xf32>
    %cst_57 = arith.constant 3.200000e+01 : f32
    %97 = vector.broadcast %cst_57 : f32 to vector<8x1xf32>
    %98 = arith.divf %96, %97 : vector<8x1xf32>
    %99 = vector.broadcast %98 : vector<8x1xf32> to vector<8x32xf32>
    %100 = arith.subf %92, %99 : vector<8x32xf32>
    %101 = arith.mulf %100, %100 : vector<8x32xf32>
    %cst_58 = arith.constant dense<0.000000e+00> : vector<8xf32>
    %102 = vector.multi_reduction <add>, %101, %cst_58 [1] : vector<8x32xf32> to vector<8xf32>
    %103 = vector.shape_cast %102 : vector<8xf32> to vector<8x1xf32>
    %cst_59 = arith.constant 3.200000e+01 : f32
    %104 = vector.broadcast %cst_59 : f32 to vector<8x1xf32>
    %105 = arith.divf %103, %104 : vector<8x1xf32>
    %106 = vector.broadcast %98 : vector<8x1xf32> to vector<8x32xf32>
    %107 = arith.subf %92, %106 : vector<8x32xf32>
    %cst_60 = arith.constant 9.99999974E-6 : f32
    %108 = vector.broadcast %cst_60 : f32 to vector<8x1xf32>
    %109 = arith.addf %105, %108 : vector<8x1xf32>
    %110 = math.rsqrt %109 : vector<8x1xf32>
    %111 = vector.broadcast %110 : vector<8x1xf32> to vector<8x32xf32>
    %112 = arith.mulf %107, %111 : vector<8x32xf32>
    %113 = vector.broadcast %93 : vector<1x32xf32> to vector<8x32xf32>
    %114 = arith.mulf %112, %113 : vector<8x32xf32>
    %115 = vector.broadcast %94 : vector<1x32xf32> to vector<8x32xf32>
    %116 = arith.addf %114, %115 : vector<8x32xf32>
    %c0_61 = arith.constant 0 : index
    %c0_62 = arith.constant 0 : index
    %c0_63 = arith.constant 0 : index
    %117 = vector.load %arg19[%c0_61, %c0_62, %c0_63] : memref<1x8x32xf32, #tpu.memory_space<vmem>>, vector<1x8x32xf32>
    %118 = vector.shape_cast %117 : vector<1x8x32xf32> to vector<8x32xf32>
    %119 = vector.shape_cast %116 : vector<8x32xf32> to vector<1x8x32xf32>
    tpu.vector_store %arg19[%c0_61, %c0_62, %c0_63], %119 {strides = array<i32>} : memref<1x8x32xf32, #tpu.memory_space<vmem>>, vector<1x8x32xf32>,
    return
  }
  func.func @transform_0(%arg0: i32, %arg1: i32) -> (i32, i32, i32) {
    %c0_i32 = arith.constant 0 : i32
    %c0_i32_0 = arith.constant 0 : i32
    %c0_i32_1 = arith.constant 0 : i32
    return %arg0, %c0_i32, %c0_i32_0 : i32, i32, i32
  }
  func.func @transform_1(%arg0: i32, %arg1: i32) -> (i32, i32) {
    %c0_i32 = arith.constant 0 : i32
    %c0_i32_0 = arith.constant 0 : i32
    %c0_i32_1 = arith.constant 0 : i32
    return %c0_i32, %c0_i32_0 : i32, i32
  }
  func.func @transform_2(%arg0: i32, %arg1: i32) -> (i32, i32) {
    %c0_i32 = arith.constant 0 : i32
    %c0_i32_0 = arith.constant 0 : i32
    %c0_i32_1 = arith.constant 0 : i32
    return %c0_i32, %c0_i32_0 : i32, i32
  }
  func.func @transform_3(%arg0: i32, %arg1: i32) -> (i32, i32) {
    %c0_i32 = arith.constant 0 : i32
    %c0_i32_0 = arith.constant 0 : i32
    %c0_i32_1 = arith.constant 0 : i32
    return %c0_i32, %c0_i32_0 : i32, i32
  }
  func.func @transform_4(%arg0: i32, %arg1: i32) -> (i32, i32) {
    %c0_i32 = arith.constant 0 : i32
    %c0_i32_0 = arith.constant 0 : i32
    %c0_i32_1 = arith.constant 0 : i32
    return %c0_i32, %c0_i32_0 : i32, i32
  }
  func.func @transform_5(%arg0: i32, %arg1: i32) -> (i32, i32) {
    %c0_i32 = arith.constant 0 : i32
    %c0_i32_0 = arith.constant 0 : i32
    %c0_i32_1 = arith.constant 0 : i32
    return %c0_i32, %c0_i32_0 : i32, i32
  }
  func.func @transform_6(%arg0: i32, %arg1: i32) -> (i32, i32) {
    %c0_i32 = arith.constant 0 : i32
    %c0_i32_0 = arith.constant 0 : i32
    %c0_i32_1 = arith.constant 0 : i32
    return %c0_i32, %c0_i32_0 : i32, i32
  }
  func.func @transform_7(%arg0: i32, %arg1: i32) -> (i32, i32) {
    %c0_i32 = arith.constant 0 : i32
    %c0_i32_0 = arith.constant 0 : i32
    %c0_i32_1 = arith.constant 0 : i32
    return %c0_i32, %c0_i32_0 : i32, i32
  }
  func.func @transform_8(%arg0: i32, %arg1: i32) -> (i32, i32) {
    %c0_i32 = arith.constant 0 : i32
    %c0_i32_0 = arith.constant 0 : i32
    %c0_i32_1 = arith.constant 0 : i32
    return %c0_i32, %c0_i32_0 : i32, i32
  }
  func.func @transform_9(%arg0: i32, %arg1: i32) -> (i32, i32) {
    %c0_i32 = arith.constant 0 : i32
    %c0_i32_0 = arith.constant 0 : i32
    %c0_i32_1 = arith.constant 0 : i32
    return %c0_i32, %c0_i32_0 : i32, i32
  }
  func.func @transform_10(%arg0: i32, %arg1: i32) -> (i32, i32) {
    %c0_i32 = arith.constant 0 : i32
    %c0_i32_0 = arith.constant 0 : i32
    %c0_i32_1 = arith.constant 0 : i32
    return %c0_i32, %c0_i32_0 : i32, i32
  }
  func.func @transform_11(%arg0: i32, %arg1: i32) -> (i32, i32) {
    %c0_i32 = arith.constant 0 : i32
    %c0_i32_0 = arith.constant 0 : i32
    %c0_i32_1 = arith.constant 0 : i32
    return %c0_i32, %c0_i32_0 : i32, i32
  }
  func.func @transform_12(%arg0: i32, %arg1: i32) -> (i32, i32) {
    %c0_i32 = arith.constant 0 : i32
    %c0_i32_0 = arith.constant 0 : i32
    %c0_i32_1 = arith.constant 0 : i32
    return %c0_i32, %c0_i32_0 : i32, i32
  }
  func.func @transform_13(%arg0: i32, %arg1: i32) -> (i32, i32) {
    %c0_i32 = arith.constant 0 : i32
    %c0_i32_0 = arith.constant 0 : i32
    %c0_i32_1 = arith.constant 0 : i32
    return %c0_i32, %c0_i32_0 : i32, i32
  }
  func.func @transform_14(%arg0: i32, %arg1: i32) -> (i32, i32) {
    %c0_i32 = arith.constant 0 : i32
    %c0_i32_0 = arith.constant 0 : i32
    %c0_i32_1 = arith.constant 0 : i32
    return %c0_i32, %c0_i32_0 : i32, i32
  }
  func.func @transform_15(%arg0: i32, %arg1: i32) -> (i32, i32) {
    %c0_i32 = arith.constant 0 : i32
    %c0_i32_0 = arith.constant 0 : i32
    %c0_i32_1 = arith.constant 0 : i32
    return %c0_i32, %c0_i32_0 : i32, i32
  }
  func.func @transform_16(%arg0: i32, %arg1: i32) -> (i32, i32) {
    %c0_i32 = arith.constant 0 : i32
    %c0_i32_0 = arith.constant 0 : i32
    %c0_i32_1 = arith.constant 0 : i32
    return %c0_i32, %c0_i32_0 : i32, i32
  }
  func.func @transform_17(%arg0: i32, %arg1: i32) -> (i32, i32, i32) {
    %c0_i32 = arith.constant 0 : i32
    %c0_i32_0 = arith.constant 0 : i32
    return %arg0, %arg1, %c0_i32 : i32, i32, i32
  }
  func.func @transform_18(%arg0: i32, %arg1: i32) -> (i32, i32, i32, i32) {
    %c0_i32 = arith.constant 0 : i32
    %c0_i32_0 = arith.constant 0 : i32
    %c0_i32_1 = arith.constant 0 : i32
    return %arg0, %c0_i32, %arg1, %c0_i32_0 : i32, i32, i32, i32
  }
}

</mosaic_0001>

<llo_original>
// kernel: tpu_custom_call.1
$region0: #{tpu_custom_call.1}
  #allocation0 [shape = 'u32[]', space=smem, size = 0x4, offset = 0x4, fixed_abs, tag = 'smem constant byte address 0x4 - core index']
  #allocation1 [shape = 'u32[144,128]{1,0:T(1,128)}', space=vmem, size = 0x12000, scoped, tag = 'internal scratch']
  %s0 = inlined_call_operand.hbm [shape: f32[2,8,32], index: 0, kind: input, shape index: {}]
  %s1 = inlined_call_operand.vmem [shape: f32[32,32], index: 1, kind: input, shape index: {}]
  %s2 = inlined_call_operand.vmem [shape: f32[1,32], index: 2, kind: input, shape index: {}]
  %s3 = inlined_call_operand.vmem [shape: f32[32,32], index: 3, kind: input, shape index: {}]
  %s4 = inlined_call_operand.vmem [shape: f32[1,32], index: 4, kind: input, shape index: {}]
  %s5 = inlined_call_operand.vmem [shape: f32[32,32], index: 5, kind: input, shape index: {}]
  %s6 = inlined_call_operand.vmem [shape: f32[1,32], index: 6, kind: input, shape index: {}]
  %s7 = inlined_call_operand.hbm [shape: f32[32,32], index: 7, kind: input, shape index: {}]
  %s8 = inlined_call_operand.vmem [shape: f32[1,32], index: 8, kind: input, shape index: {}]
  %s9 = inlined_call_operand.vmem [shape: f32[1,32], index: 9, kind: input, shape index: {}]
  %s10 = inlined_call_operand.vmem [shape: f32[1,32], index: 10, kind: input, shape index: {}]
  %s11 = inlined_call_operand.hbm [shape: f32[32,64], index: 11, kind: input, shape index: {}]
  %s12 = inlined_call_operand.vmem [shape: f32[1,64], index: 12, kind: input, shape index: {}]
  %s13 = inlined_call_operand.vmem [shape: f32[64,32], index: 13, kind: input, shape index: {}]
  %s14 = inlined_call_operand.vmem [shape: f32[1,32], index: 14, kind: input, shape index: {}]
  %s15 = inlined_call_operand.vmem [shape: f32[1,32], index: 15, kind: input, shape index: {}]
  %s16 = inlined_call_operand.vmem [shape: f32[1,32], index: 16, kind: input, shape index: {}]
  %s17 = inlined_call_operand.hbm [shape: f32[2,8,32], index: 17, kind: output, shape index: {0}]
  %s18 = inlined_call_operand.hbm [shape: f32[2,4,8,8], index: 18, kind: output, shape index: {1}]
  %19 = xla_tuple %s17, %s18
  %s20 = sld [smem:[#allocation0]]
  $region121: #{tpu_custom_call.1} parent=0
    _
  %s22 = ssub.s32 1, %s20
  %s23 = scalar_select 0, %s22, %s20
  $region1: #{tpu_custom_call.1} parent=0
    #allocation2 [shape = 'u8[8192]{0}', space=vmem, size = 0x2000, scoped, tag = 'input window, operand 0']
    #allocation3 [shape = 's32[2]{0}', space=sflag, size = 0x8, scoped, tag = 'scoped memory for tpu_custom_call.1']
    #allocation4 [shape = 's32[2]{0}', space=sflag, size = 0x8, scoped, tag = 'scoped memory for tpu_custom_call.1']
    #allocation5 [shape = 'u8[16384]{0}', space=vmem, size = 0x4000, scoped, tag = 'input window, operand 7, single buffered']
    #allocation6 [shape = 's32[1]{0}', space=sflag, size = 0x4, scoped, tag = 'scoped memory for tpu_custom_call.1']
    #allocation7 [shape = 'u8[16384]{0}', space=vmem, size = 0x4000, scoped, tag = 'input window, operand 11, single buffered']
    #allocation8 [shape = 'u8[8192]{0}', space=vmem, size = 0x2000, scoped, tag = 'output window, operand 0']
    #allocation9 [shape = 'u8[32768]{0}', space=vmem, size = 0x8000, scoped, tag = 'output window, operand 1']
    #allocation10 [shape = 's32[2]{0}', space=sflag, size = 0x8, scoped, tag = 'scoped memory for tpu_custom_call.1']
    %24 = vsyncpa [#allocation3], 0
    %s25 = scalar_lea.sflag [#allocation3], 1
    %26 = vsyncpa %s25, 0
    %27 = vsyncpa [#allocation6], 0
    %28 = vsyncpa [#allocation4], 0
    %s29 = scalar_lea.sflag [#allocation4], 1
    %30 = vsyncpa %s29, 0
    %31 = vsyncpa [#allocation10], 0
    %s32 = scalar_lea.sflag [#allocation10], 1
    %33 = vsyncpa %s32, 0
    loop: start=0, step=1, limit=4
    $region2: #{tpu_custom_call.1} parent=1 // loop_pre_header
      _
    $region3: #{tpu_custom_call.1} parent=1 // loop_header
      %s35 = sphi 0, %s39
      %p36 = scmp.ge.s32.totalorder %s35, 4
      %s42 = sphi 0, %s54
      %s43 = sphi 0, %s50
      %s44 = sphi 0, %s42
      %s45 = sphi 0, %s43
      %s46 = sphi 0, %s44
      %s47 = sphi 0, %s45
      %s57 = sphi 0, %s59
      %s60 = sphi 0, %s57
      %s61 = sphi 0, %s60
      %s77 = sphi 0, %s61
      %s81 = sphi 0, %s81
      %s83 = sphi 0, %s81
      %s84 = sphi 0, %s83
      %s98 = sphi 0, %s84
      %s102 = sphi 0, %s102
      %s104 = sphi 0, %s102
      %s105 = sphi 0, %s104
      %s119 = sphi 0, %s105
      %s123 = sphi 0, %s123
      %s125 = sphi 0, %s123
      %s126 = sphi 0, %s125
      %s140 = sphi 0, %s126
      %s144 = sphi 0, %s144
      %s146 = sphi 0, %s144
      %s147 = sphi 0, %s146
      %s161 = sphi 0, %s147
      %s165 = sphi 0, %s165
      %s167 = sphi 0, %s165
      %s168 = sphi 0, %s167
      %s182 = sphi 0, %s168
      %s186 = sphi 0, %s186
      %s188 = sphi 0, %s186
      %s189 = sphi 0, %s188
      %s203 = sphi 0, %s189
      %s207 = sphi 0, %s207
      %s209 = sphi 0, %s207
      %s210 = sphi 0, %s209
      %s224 = sphi 0, %s210
      %s228 = sphi 0, %s228
      %s230 = sphi 0, %s228
      %s231 = sphi 0, %s230
      %s245 = sphi 0, %s231
      %s249 = sphi 0, %s249
      %s251 = sphi 0, %s249
      %s252 = sphi 0, %s251
      %s266 = sphi 0, %s252
      %s270 = sphi 0, %s270
      %s272 = sphi 0, %s270
      %s273 = sphi 0, %s272
      %s287 = sphi 0, %s273
      %s291 = sphi 0, %s291
      %s293 = sphi 0, %s291
      %s294 = sphi 0, %s293
      %s308 = sphi 0, %s294
      %s312 = sphi 0, %s312
      %s314 = sphi 0, %s312
      %s315 = sphi 0, %s314
      %s329 = sphi 0, %s315
      %s333 = sphi 0, %s333
      %s335 = sphi 0, %s333
      %s336 = sphi 0, %s335
      %s350 = sphi 0, %s336
      %s354 = sphi 0, %s354
      %s356 = sphi 0, %s354
      %s357 = sphi 0, %s356
      %s371 = sphi 0, %s357
      %s375 = sphi 0, %s375
      %s377 = sphi 0, %s375
      %s378 = sphi 0, %s377
      %s392 = sphi 0, %s378
      %s396 = sphi 0, %s396
      %s398 = sphi 0, %s396
      %s399 = sphi 0, %s398
      %s413 = sphi 0, %s399
      %s421 = sphi 0, %s423
      %s424 = sphi 0, %s421
      %s425 = sphi 0, %s424
      %s441 = sphi 0, %s425
      %s449 = sphi 0, %s451
      %s452 = sphi 0, %s449
      %s453 = sphi 0, %s452
      %s469 = sphi 0, %s453
    $region4: #{tpu_custom_call.1} parent=1 // loop_header_branch
      %38 = sbr.rel (%p36) target = $region8
    $region5: #{tpu_custom_call.1} parent=1 // loop_body
      %s40 = ssub.s32 %s35, 1
      %s41 = ssub.s32 %s35, 2
      %s48 = sadd.s32 1, %s43
      %p49 = scmp.ge.s32.totalorder %s48, 1
      %s50 = scalar_select %p49, 0, %s48
      %s51 = sadd.s32 1, %s42
      %s52 = scalar_select %p49, %s51, %s42
      %p53 = scmp.ge.s32.totalorder %s52, 2
      %s54 = scalar_select %p53, 0, %s52
      %s55 = ssub.s32 %s42, %s54
      %p56 = scmp.eq.s32.totalorder %s55, 0
      %s58 = sadd.s32 %s57, 1
      %s59 = scalar_select %p56, %s57, %s58
      %p62 = pneg %p56
      %p63 = scmp.eq.s32.totalorder %s35, 1
      %p64 = por %p62, %p63
      %p65 = scmp.ne.s32.totalorder %s57, %s60
      %p66 = scmp.eq.s32.totalorder %s35, 0
      %p67 = por %p65, %p66
      %p68 = scmp.ne.s32.totalorder %s57, %s60
      %p69 = scmp.eq.s32.totalorder %s40, 1
      %p70 = por %p68, %p69
      %p71 = scmp.ne.s32.totalorder %s60, %s61
      %p72 = scmp.eq.s32.totalorder %s40, 0
      %p73 = por %p71, %p72
      %p74 = scmp.ne.s32.totalorder %s60, %s61
      %p75 = scmp.eq.s32.totalorder %s41, 1
      %p76 = por %p74, %p75
      %p78 = scmp.ne.s32.totalorder %s61, %s77
      %p79 = scmp.eq.s32.totalorder %s41, 0
      %p80 = por %p78, %p79
      %s82 = sadd.s32 %s81, 1
      %p85 = scmp.eq.s32.totalorder %s35, 1
      %p86 = scmp.ne.s32.totalorder %s81, %s83
      %p87 = scmp.eq.s32.totalorder %s35, 0
      %p88 = por %p86, %p87
      %p89 = scmp.ne.s32.totalorder %s81, %s83
      %p90 = scmp.eq.s32.totalorder %s40, 1
      %p91 = por %p89, %p90
      %p92 = scmp.ne.s32.totalorder %s83, %s84
      %p93 = scmp.eq.s32.totalorder %s40, 0
      %p94 = por %p92, %p93
      %p95 = scmp.ne.s32.totalorder %s83, %s84
      %p96 = scmp.eq.s32.totalorder %s41, 1
      %p97 = por %p95, %p96
      %p99 = scmp.ne.s32.totalorder %s84, %s98
      %p100 = scmp.eq.s32.totalorder %s41, 0
      %p101 = por %p99, %p100
      %s103 = sadd.s32 %s102, 1
      %p106 = scmp.eq.s32.totalorder %s35, 1
      %p107 = scmp.ne.s32.totalorder %s102, %s104
      %p108 = scmp.eq.s32.totalorder %s35, 0
      %p109 = por %p107, %p108
      %p110 = scmp.ne.s32.totalorder %s102, %s104
      %p111 = scmp.eq.s32.totalorder %s40, 1
      %p112 = por %p110, %p111
      %p113 = scmp.ne.s32.totalorder %s104, %s105
      %p114 = scmp.eq.s32.totalorder %s40, 0
      %p115 = por %p113, %p114
      %p116 = scmp.ne.s32.totalorder %s104, %s105
      %p117 = scmp.eq.s32.totalorder %s41, 1
      %p118 = por %p116, %p117
      %p120 = scmp.ne.s32.totalorder %s105, %s119
      %p121 = scmp.eq.s32.totalorder %s41, 0
      %p122 = por %p120, %p121
      %s124 = sadd.s32 %s123, 1
      %p127 = scmp.eq.s32.totalorder %s35, 1
      %p128 = scmp.ne.s32.totalorder %s123, %s125
      %p129 = scmp.eq.s32.totalorder %s35, 0
      %p130 = por %p128, %p129
      %p131 = scmp.ne.s32.totalorder %s123, %s125
      %p132 = scmp.eq.s32.totalorder %s40, 1
      %p133 = por %p131, %p132
      %p134 = scmp.ne.s32.totalorder %s125, %s126
      %p135 = scmp.eq.s32.totalorder %s40, 0
      %p136 = por %p134, %p135
      %p137 = scmp.ne.s32.totalorder %s125, %s126
      %p138 = scmp.eq.s32.totalorder %s41, 1
      %p139 = por %p137, %p138
      %p141 = scmp.ne.s32.totalorder %s126, %s140
      %p142 = scmp.eq.s32.totalorder %s41, 0
      %p143 = por %p141, %p142
      %s145 = sadd.s32 %s144, 1
      %p148 = scmp.eq.s32.totalorder %s35, 1
      %p149 = scmp.ne.s32.totalorder %s144, %s146
      %p150 = scmp.eq.s32.totalorder %s35, 0
      %p151 = por %p149, %p150
      %p152 = scmp.ne.s32.totalorder %s144, %s146
      %p153 = scmp.eq.s32.totalorder %s40, 1
      %p154 = por %p152, %p153
      %p155 = scmp.ne.s32.totalorder %s146, %s147
      %p156 = scmp.eq.s32.totalorder %s40, 0
      %p157 = por %p155, %p156
      %p158 = scmp.ne.s32.totalorder %s146, %s147
      %p159 = scmp.eq.s32.totalorder %s41, 1
      %p160 = por %p158, %p159
      %p162 = scmp.ne.s32.totalorder %s147, %s161
      %p163 = scmp.eq.s32.totalorder %s41, 0
      %p164 = por %p162, %p163
      %s166 = sadd.s32 %s165, 1
      %p169 = scmp.eq.s32.totalorder %s35, 1
      %p170 = scmp.ne.s32.totalorder %s165, %s167
      %p171 = scmp.eq.s32.totalorder %s35, 0
      %p172 = por %p170, %p171
      %p173 = scmp.ne.s32.totalorder %s165, %s167
      %p174 = scmp.eq.s32.totalorder %s40, 1
      %p175 = por %p173, %p174
      %p176 = scmp.ne.s32.totalorder %s167, %s168
      %p177 = scmp.eq.s32.totalorder %s40, 0
      %p178 = por %p176, %p177
      %p179 = scmp.ne.s32.totalorder %s167, %s168
      %p180 = scmp.eq.s32.totalorder %s41, 1
      %p181 = por %p179, %p180
      %p183 = scmp.ne.s32.totalorder %s168, %s182
      %p184 = scmp.eq.s32.totalorder %s41, 0
      %p185 = por %p183, %p184
      %s187 = sadd.s32 %s186, 1
      %p190 = scmp.eq.s32.totalorder %s35, 1
      %p191 = scmp.ne.s32.totalorder %s186, %s188
      %p192 = scmp.eq.s32.totalorder %s35, 0
      %p193 = por %p191, %p192
      %p194 = scmp.ne.s32.totalorder %s186, %s188
      %p195 = scmp.eq.s32.totalorder %s40, 1
      %p196 = por %p194, %p195
      %p197 = scmp.ne.s32.totalorder %s188, %s189
      %p198 = scmp.eq.s32.totalorder %s40, 0
      %p199 = por %p197, %p198
      %p200 = scmp.ne.s32.totalorder %s188, %s189
      %p201 = scmp.eq.s32.totalorder %s41, 1
      %p202 = por %p200, %p201
      %p204 = scmp.ne.s32.totalorder %s189, %s203
      %p205 = scmp.eq.s32.totalorder %s41, 0
      %p206 = por %p204, %p205
      %s208 = sadd.s32 %s207, 1
      %p211 = scmp.eq.s32.totalorder %s35, 1
      %p212 = scmp.ne.s32.totalorder %s207, %s209
      %p213 = scmp.eq.s32.totalorder %s35, 0
      %p214 = por %p212, %p213
      %p215 = scmp.ne.s32.totalorder %s207, %s209
      %p216 = scmp.eq.s32.totalorder %s40, 1
      %p217 = por %p215, %p216
      %p218 = scmp.ne.s32.totalorder %s209, %s210
      %p219 = scmp.eq.s32.totalorder %s40, 0
      %p220 = por %p218, %p219
      %p221 = scmp.ne.s32.totalorder %s209, %s210
      %p222 = scmp.eq.s32.totalorder %s41, 1
      %p223 = por %p221, %p222
      %p225 = scmp.ne.s32.totalorder %s210, %s224
      %p226 = scmp.eq.s32.totalorder %s41, 0
      %p227 = por %p225, %p226
      %s229 = sadd.s32 %s228, 1
      %p232 = scmp.eq.s32.totalorder %s35, 1
      %p233 = scmp.ne.s32.totalorder %s228, %s230
      %p234 = scmp.eq.s32.totalorder %s35, 0
      %p235 = por %p233, %p234
      %p236 = scmp.ne.s32.totalorder %s228, %s230
      %p237 = scmp.eq.s32.totalorder %s40, 1
      %p238 = por %p236, %p237
      %p239 = scmp.ne.s32.totalorder %s230, %s231
      %p240 = scmp.eq.s32.totalorder %s40, 0
      %p241 = por %p239, %p240
      %p242 = scmp.ne.s32.totalorder %s230, %s231
      %p243 = scmp.eq.s32.totalorder %s41, 1
      %p244 = por %p242, %p243
      %p246 = scmp.ne.s32.totalorder %s231, %s245
      %p247 = scmp.eq.s32.totalorder %s41, 0
      %p248 = por %p246, %p247
      %s250 = sadd.s32 %s249, 1
      %p253 = scmp.eq.s32.totalorder %s35, 1
      %p254 = scmp.ne.s32.totalorder %s249, %s251
      %p255 = scmp.eq.s32.totalorder %s35, 0
      %p256 = por %p254, %p255
      %p257 = scmp.ne.s32.totalorder %s249, %s251
      %p258 = scmp.eq.s32.totalorder %s40, 1
      %p259 = por %p257, %p258
      %p260 = scmp.ne.s32.totalorder %s251, %s252
      %p261 = scmp.eq.s32.totalorder %s40, 0
      %p262 = por %p260, %p261
      %p263 = scmp.ne.s32.totalorder %s251, %s252
      %p264 = scmp.eq.s32.totalorder %s41, 1
      %p265 = por %p263, %p264
      %p267 = scmp.ne.s32.totalorder %s252, %s266
      %p268 = scmp.eq.s32.totalorder %s41, 0
      %p269 = por %p267, %p268
      %s271 = sadd.s32 %s270, 1
      %p274 = scmp.eq.s32.totalorder %s35, 1
      %p275 = scmp.ne.s32.totalorder %s270, %s272
      %p276 = scmp.eq.s32.totalorder %s35, 0
      %p277 = por %p275, %p276
      %p278 = scmp.ne.s32.totalorder %s270, %s272
      %p279 = scmp.eq.s32.totalorder %s40, 1
      %p280 = por %p278, %p279
      %p281 = scmp.ne.s32.totalorder %s272, %s273
      %p282 = scmp.eq.s32.totalorder %s40, 0
      %p283 = por %p281, %p282
      %p284 = scmp.ne.s32.totalorder %s272, %s273
      %p285 = scmp.eq.s32.totalorder %s41, 1
      %p286 = por %p284, %p285
      %p288 = scmp.ne.s32.totalorder %s273, %s287
      %p289 = scmp.eq.s32.totalorder %s41, 0
      %p290 = por %p288, %p289
      %s292 = sadd.s32 %s291, 1
      %p295 = scmp.eq.s32.totalorder %s35, 1
      %p296 = scmp.ne.s32.totalorder %s291, %s293
      %p297 = scmp.eq.s32.totalorder %s35, 0
      %p298 = por %p296, %p297
      %p299 = scmp.ne.s32.totalorder %s291, %s293
      %p300 = scmp.eq.s32.totalorder %s40, 1
      %p301 = por %p299, %p300
      %p302 = scmp.ne.s32.totalorder %s293, %s294
      %p303 = scmp.eq.s32.totalorder %s40, 0
      %p304 = por %p302, %p303
      %p305 = scmp.ne.s32.totalorder %s293, %s294
      %p306 = scmp.eq.s32.totalorder %s41, 1
      %p307 = por %p305, %p306
      %p309 = scmp.ne.s32.totalorder %s294, %s308
      %p310 = scmp.eq.s32.totalorder %s41, 0
      %p311 = por %p309, %p310
      %s313 = sadd.s32 %s312, 1
      %p316 = scmp.eq.s32.totalorder %s35, 1
      %p317 = scmp.ne.s32.totalorder %s312, %s314
      %p318 = scmp.eq.s32.totalorder %s35, 0
      %p319 = por %p317, %p318
      %p320 = scmp.ne.s32.totalorder %s312, %s314
      %p321 = scmp.eq.s32.totalorder %s40, 1
      %p322 = por %p320, %p321
      %p323 = scmp.ne.s32.totalorder %s314, %s315
      %p324 = scmp.eq.s32.totalorder %s40, 0
      %p325 = por %p323, %p324
      %p326 = scmp.ne.s32.totalorder %s314, %s315
      %p327 = scmp.eq.s32.totalorder %s41, 1
      %p328 = por %p326, %p327
      %p330 = scmp.ne.s32.totalorder %s315, %s329
      %p331 = scmp.eq.s32.totalorder %s41, 0
      %p332 = por %p330, %p331
      %s334 = sadd.s32 %s333, 1
      %p337 = scmp.eq.s32.totalorder %s35, 1
      %p338 = scmp.ne.s32.totalorder %s333, %s335
      %p339 = scmp.eq.s32.totalorder %s35, 0
      %p340 = por %p338, %p339
      %p341 = scmp.ne.s32.totalorder %s333, %s335
      %p342 = scmp.eq.s32.totalorder %s40, 1
      %p343 = por %p341, %p342
      %p344 = scmp.ne.s32.totalorder %s335, %s336
      %p345 = scmp.eq.s32.totalorder %s40, 0
      %p346 = por %p344, %p345
      %p347 = scmp.ne.s32.totalorder %s335, %s336
      %p348 = scmp.eq.s32.totalorder %s41, 1
      %p349 = por %p347, %p348
      %p351 = scmp.ne.s32.totalorder %s336, %s350
      %p352 = scmp.eq.s32.totalorder %s41, 0
      %p353 = por %p351, %p352
      %s355 = sadd.s32 %s354, 1
      %p358 = scmp.eq.s32.totalorder %s35, 1
      %p359 = scmp.ne.s32.totalorder %s354, %s356
      %p360 = scmp.eq.s32.totalorder %s35, 0
      %p361 = por %p359, %p360
      %p362 = scmp.ne.s32.totalorder %s354, %s356
      %p363 = scmp.eq.s32.totalorder %s40, 1
      %p364 = por %p362, %p363
      %p365 = scmp.ne.s32.totalorder %s356, %s357
      %p366 = scmp.eq.s32.totalorder %s40, 0
      %p367 = por %p365, %p366
      %p368 = scmp.ne.s32.totalorder %s356, %s357
      %p369 = scmp.eq.s32.totalorder %s41, 1
      %p370 = por %p368, %p369
      %p372 = scmp.ne.s32.totalorder %s357, %s371
      %p373 = scmp.eq.s32.totalorder %s41, 0
      %p374 = por %p372, %p373
      %s376 = sadd.s32 %s375, 1
      %p379 = scmp.eq.s32.totalorder %s35, 1
      %p380 = scmp.ne.s32.totalorder %s375, %s377
      %p381 = scmp.eq.s32.totalorder %s35, 0
      %p382 = por %p380, %p381
      %p383 = scmp.ne.s32.totalorder %s375, %s377
      %p384 = scmp.eq.s32.totalorder %s40, 1
      %p385 = por %p383, %p384
      %p386 = scmp.ne.s32.totalorder %s377, %s378
      %p387 = scmp.eq.s32.totalorder %s40, 0
      %p388 = por %p386, %p387
      %p389 = scmp.ne.s32.totalorder %s377, %s378
      %p390 = scmp.eq.s32.totalorder %s41, 1
      %p391 = por %p389, %p390
      %p393 = scmp.ne.s32.totalorder %s378, %s392
      %p394 = scmp.eq.s32.totalorder %s41, 0
      %p395 = por %p393, %p394
      %s397 = sadd.s32 %s396, 1
      %p400 = scmp.eq.s32.totalorder %s35, 1
      %p401 = scmp.ne.s32.totalorder %s396, %s398
      %p402 = scmp.eq.s32.totalorder %s35, 0
      %p403 = por %p401, %p402
      %p404 = scmp.ne.s32.totalorder %s396, %s398
      %p405 = scmp.eq.s32.totalorder %s40, 1
      %p406 = por %p404, %p405
      %p407 = scmp.ne.s32.totalorder %s398, %s399
      %p408 = scmp.eq.s32.totalorder %s40, 0
      %p409 = por %p407, %p408
      %p410 = scmp.ne.s32.totalorder %s398, %s399
      %p411 = scmp.eq.s32.totalorder %s41, 1
      %p412 = por %p410, %p411
      %p414 = scmp.ne.s32.totalorder %s399, %s413
      %p415 = scmp.eq.s32.totalorder %s41, 0
      %p416 = por %p414, %p415
      %s417 = ssub.s32 %s42, %s54
      %s418 = ssub.s32 %s43, %s50
      %s419 = sor.u32 %s417, %s418
      %p420 = scmp.eq.s32.totalorder %s419, 0
      %s422 = sadd.s32 %s421, 1
      %s423 = scalar_select %p420, %s421, %s422
      %p426 = pneg %p420
      %p427 = scmp.eq.s32.totalorder %s35, 1
      %p428 = por %p426, %p427
      %p429 = scmp.ne.s32.totalorder %s421, %s424
      %p430 = scmp.eq.s32.totalorder %s35, 0
      %p431 = por %p429, %p430
      %p432 = scmp.ne.s32.totalorder %s421, %s424
      %p433 = scmp.eq.s32.totalorder %s40, 1
      %p434 = por %p432, %p433
      %p435 = scmp.ne.s32.totalorder %s424, %s425
      %p436 = scmp.eq.s32.totalorder %s40, 0
      %p437 = por %p435, %p436
      %p438 = scmp.ne.s32.totalorder %s424, %s425
      %p439 = scmp.eq.s32.totalorder %s41, 1
      %p440 = por %p438, %p439
      %p442 = scmp.ne.s32.totalorder %s425, %s441
      %p443 = scmp.eq.s32.totalorder %s41, 0
      %p444 = por %p442, %p443
      %s445 = ssub.s32 %s42, %s54
      %s446 = ssub.s32 %s43, %s50
      %s447 = sor.u32 %s445, %s446
      %p448 = scmp.eq.s32.totalorder %s447, 0
      %s450 = sadd.s32 %s449, 1
      %s451 = scalar_select %p448, %s449, %s450
      %p454 = pneg %p448
      %p455 = scmp.eq.s32.totalorder %s35, 1
      %p456 = por %p454, %p455
      %p457 = scmp.ne.s32.totalorder %s449, %s452
      %p458 = scmp.eq.s32.totalorder %s35, 0
      %p459 = por %p457, %p458
      %p460 = scmp.ne.s32.totalorder %s449, %s452
      %p461 = scmp.eq.s32.totalorder %s40, 1
      %p462 = por %p460, %p461
      %p463 = scmp.ne.s32.totalorder %s452, %s453
      %p464 = scmp.eq.s32.totalorder %s40, 0
      %p465 = por %p463, %p464
      %p466 = scmp.ne.s32.totalorder %s452, %s453
      %p467 = scmp.eq.s32.totalorder %s41, 1
      %p468 = por %p466, %p467
      %p470 = scmp.ne.s32.totalorder %s453, %s469
      %p471 = scmp.eq.s32.totalorder %s41, 0
      %p472 = por %p470, %p471
      %p473 = scmp.le.s32.totalorder 1, %s35
      %p474 = scmp.lt.s32.totalorder %s35, 3
      %p475 = pnand %p473, %p474
      %p476 = pneg %p475
      // Predicated region
      $region9: #{tpu_custom_call.1} parent=5 // pred_check
        _
      $region10: #{tpu_custom_call.1} parent=5 // pred_check_branch
        %478 = sbr.rel (%p475) target = $region12
      $region11: #{tpu_custom_call.1} parent=5 // pred_region
        %s479 = ssub.s32 %s35, 1
        // Predicated region
        $region13: #{tpu_custom_call.1} parent=11 // pred_check
          %p480 = pneg %p94
        $region14: #{tpu_custom_call.1} parent=11 // pred_check_branch
          %482 = sbr.rel (%p480) target = $region16
        $region15: #{tpu_custom_call.1} parent=11 // pred_region
          _
        $region16: #{tpu_custom_call.1} parent=11 // pred_fallthru
          _
        // Predicated region
        $region17: #{tpu_custom_call.1} parent=11 // pred_check
          %p483 = pneg %p115
        $region18: #{tpu_custom_call.1} parent=11 // pred_check_branch
          %485 = sbr.rel (%p483) target = $region20
        $region19: #{tpu_custom_call.1} parent=11 // pred_region
          _
        $region20: #{tpu_custom_call.1} parent=11 // pred_fallthru
          _
        // Predicated region
        $region21: #{tpu_custom_call.1} parent=11 // pred_check
          %p486 = pneg %p136
        $region22: #{tpu_custom_call.1} parent=11 // pred_check_branch
          %488 = sbr.rel (%p486) target = $region24
        $region23: #{tpu_custom_call.1} parent=11 // pred_region
          _
        $region24: #{tpu_custom_call.1} parent=11 // pred_fallthru
          _
        // Predicated region
        $region25: #{tpu_custom_call.1} parent=11 // pred_check
          %p489 = pneg %p157
        $region26: #{tpu_custom_call.1} parent=11 // pred_check_branch
          %491 = sbr.rel (%p489) target = $region28
        $region27: #{tpu_custom_call.1} parent=11 // pred_region
          _
        $region28: #{tpu_custom_call.1} parent=11 // pred_fallthru
          _
        // Predicated region
        $region29: #{tpu_custom_call.1} parent=11 // pred_check
          %p492 = pneg %p178
        $region30: #{tpu_custom_call.1} parent=11 // pred_check_branch
          %494 = sbr.rel (%p492) target = $region32
        $region31: #{tpu_custom_call.1} parent=11 // pred_region
          _
        $region32: #{tpu_custom_call.1} parent=11 // pred_fallthru
          _
        // Predicated region
        $region33: #{tpu_custom_call.1} parent=11 // pred_check
          %p495 = pneg %p199
        $region34: #{tpu_custom_call.1} parent=11 // pred_check_branch
          %497 = sbr.rel (%p495) target = $region36
        $region35: #{tpu_custom_call.1} parent=11 // pred_region
          _
        $region36: #{tpu_custom_call.1} parent=11 // pred_fallthru
          _
        // Predicated region
        $region37: #{tpu_custom_call.1} parent=11 // pred_check
          %p498 = pneg %p220
        $region38: #{tpu_custom_call.1} parent=11 // pred_check_branch
          %500 = sbr.rel (%p498) target = $region40
        $region39: #{tpu_custom_call.1} parent=11 // pred_region
          %s502 = ssub.s32 512, 512
          %503 = vsyncadd [#allocation6], %s502
          %s504 = sshll.u32 [#allocation5], 4
          %s505 = int_to_ptr.vmem [resolvable:$true] %s504
          %510 = dma.hbm_to_vmem [thread:$0]  %s7, 512, %s505, [#allocation6], 128, 128, 8
        $region40: #{tpu_custom_call.1} parent=11 // pred_fallthru
          _
        // Predicated region
        $region41: #{tpu_custom_call.1} parent=11 // pred_check
          %p511 = pneg %p241
        $region42: #{tpu_custom_call.1} parent=11 // pred_check_branch
          %513 = sbr.rel (%p511) target = $region44
        $region43: #{tpu_custom_call.1} parent=11 // pred_region
          _
        $region44: #{tpu_custom_call.1} parent=11 // pred_fallthru
          _
        // Predicated region
        $region45: #{tpu_custom_call.1} parent=11 // pred_check
          %p514 = pneg %p262
        $region46: #{tpu_custom_call.1} parent=11 // pred_check_branch
          %516 = sbr.rel (%p514) target = $region48
        $region47: #{tpu_custom_call.1} parent=11 // pred_region
          _
        $region48: #{tpu_custom_call.1} parent=11 // pred_fallthru
          _
        // Predicated region
        $region49: #{tpu_custom_call.1} parent=11 // pred_check
          %p517 = pneg %p283
        $region50: #{tpu_custom_call.1} parent=11 // pred_check_branch
          %519 = sbr.rel (%p517) target = $region52
        $region51: #{tpu_custom_call.1} parent=11 // pred_region
          _
        $region52: #{tpu_custom_call.1} parent=11 // pred_fallthru
          _
        // Predicated region
        $region53: #{tpu_custom_call.1} parent=11 // pred_check
          %p520 = pneg %p304
        $region54: #{tpu_custom_call.1} parent=11 // pred_check_branch
          %522 = sbr.rel (%p520) target = $region56
        $region55: #{tpu_custom_call.1} parent=11 // pred_region
          %s524 = ssub.s32 512, 512
          %525 = vsyncadd [#allocation6], %s524
          %s526 = sshll.u32 [#allocation7], 4
          %s527 = int_to_ptr.vmem [resolvable:$true] %s526
          %532 = dma.hbm_to_vmem [thread:$0]  %s11, 512, %s527, [#allocation6], 128, 128, 8
        $region56: #{tpu_custom_call.1} parent=11 // pred_fallthru
          _
        // Predicated region
        $region57: #{tpu_custom_call.1} parent=11 // pred_check
          %p533 = pneg %p325
        $region58: #{tpu_custom_call.1} parent=11 // pred_check_branch
          %535 = sbr.rel (%p533) target = $region60
        $region59: #{tpu_custom_call.1} parent=11 // pred_region
          _
        $region60: #{tpu_custom_call.1} parent=11 // pred_fallthru
          _
        // Predicated region
        $region61: #{tpu_custom_call.1} parent=11 // pred_check
          %p536 = pneg %p346
        $region62: #{tpu_custom_call.1} parent=11 // pred_check_branch
          %538 = sbr.rel (%p536) target = $region64
        $region63: #{tpu_custom_call.1} parent=11 // pred_region
          _
        $region64: #{tpu_custom_call.1} parent=11 // pred_fallthru
          _
        // Predicated region
        $region65: #{tpu_custom_call.1} parent=11 // pred_check
          %p539 = pneg %p367
        $region66: #{tpu_custom_call.1} parent=11 // pred_check_branch
          %541 = sbr.rel (%p539) target = $region68
        $region67: #{tpu_custom_call.1} parent=11 // pred_region
          _
        $region68: #{tpu_custom_call.1} parent=11 // pred_fallthru
          _
        // Predicated region
        $region69: #{tpu_custom_call.1} parent=11 // pred_check
          %p542 = pneg %p388
        $region70: #{tpu_custom_call.1} parent=11 // pred_check_branch
          %544 = sbr.rel (%p542) target = $region72
        $region71: #{tpu_custom_call.1} parent=11 // pred_region
          _
        $region72: #{tpu_custom_call.1} parent=11 // pred_fallthru
          _
        // Predicated region
        $region73: #{tpu_custom_call.1} parent=11 // pred_check
          %p545 = pneg %p409
        $region74: #{tpu_custom_call.1} parent=11 // pred_check_branch
          %547 = sbr.rel (%p545) target = $region76
        $region75: #{tpu_custom_call.1} parent=11 // pred_region
          _
        $region76: #{tpu_custom_call.1} parent=11 // pred_fallthru
          _
      $region12: #{tpu_custom_call.1} parent=5 // pred_fallthru
        _
      %p548 = scmp.lt.s32.totalorder %s35, 2
      // Predicated region
      $region77: #{tpu_custom_call.1} parent=5 // pred_check
        %p549 = pneg %p548
      $region78: #{tpu_custom_call.1} parent=5 // pred_check_branch
        %551 = sbr.rel (%p549) target = $region80
      $region79: #{tpu_custom_call.1} parent=5 // pred_region
        // Predicated region
        $region81: #{tpu_custom_call.1} parent=79 // pred_check
          %p552 = pneg %p67
        $region82: #{tpu_custom_call.1} parent=79 // pred_check_branch
          %554 = sbr.rel (%p552) target = $region84
        $region83: #{tpu_custom_call.1} parent=79 // pred_region
          %s555 = sand.u32 %s57, 1
          %s556 = scalar_lea.sflag [#allocation3], %s555
          %s557 = sand.u32 %s57, 1
          %s558 = smul.addr %s557, 8
          %s559 = scalar_lea.vmem [#allocation2], %s558
          %s561 = ssub.s32 128, 128
          %562 = vsyncadd %s556, %s561
          %s563 = smul.addr %s42, 128
          %s564 = scalar_lea.hbm %s0, %s563
          %s566 = sshll.u32 %s559, 4
          %s567 = int_to_ptr.vmem [resolvable:$true] %s566
          %569 = dma.hbm_to_vmem [thread:$0]  %s564, 128, %s567, %s556
        $region84: #{tpu_custom_call.1} parent=79 // pred_fallthru
          _
      $region80: #{tpu_custom_call.1} parent=5 // pred_fallthru
        _
      %p570 = scmp.le.s32.totalorder 1, %s35
      %p571 = scmp.lt.s32.totalorder %s35, 3
      %p572 = pnand %p570, %p571
      %p573 = pneg %p572
      // Predicated region
      $region85: #{tpu_custom_call.1} parent=5 // pred_check
        _
      $region86: #{tpu_custom_call.1} parent=5 // pred_check_branch
        %575 = sbr.rel (%p572) target = $region88
      $region87: #{tpu_custom_call.1} parent=5 // pred_region
        %s576 = ssub.s32 %s35, 1
        %s577 = sand.u32 %s60, 1
        %s578 = scalar_lea.sflag [#allocation3], %s577
        %s579 = sand.u32 %s60, 1
        %s580 = smul.addr %s579, 8
        %s581 = scalar_lea.vmem [#allocation2], %s580
        // Predicated region
        $region89: #{tpu_custom_call.1} parent=87 // pred_check
          %p582 = pneg %p73
        $region90: #{tpu_custom_call.1} parent=87 // pred_check_branch
          %584 = sbr.rel (%p582) target = $region92
        $region91: #{tpu_custom_call.1} parent=87 // pred_region
          %585 = dma.done %s578, 128
        $region92: #{tpu_custom_call.1} parent=87 // pred_fallthru
          _
        // Predicated region
        $region93: #{tpu_custom_call.1} parent=87 // pred_check
          %p586 = pneg %p220
        $region94: #{tpu_custom_call.1} parent=87 // pred_check_branch
          %588 = sbr.rel (%p586) target = $region96
        $region95: #{tpu_custom_call.1} parent=87 // pred_region
          %589 = dma.done [#allocation6], 512
        $region96: #{tpu_custom_call.1} parent=87 // pred_fallthru
          _
        // Predicated region
        $region97: #{tpu_custom_call.1} parent=87 // pred_check
          %p590 = pneg %p304
        $region98: #{tpu_custom_call.1} parent=87 // pred_check_branch
          %592 = sbr.rel (%p590) target = $region100
        $region99: #{tpu_custom_call.1} parent=87 // pred_region
          %593 = dma.done [#allocation6], 512
        $region100: #{tpu_custom_call.1} parent=87 // pred_fallthru
          _
        %s594 = sand.u32 %s60, 1
        %s595 = scalar_lea.sflag [#allocation3], %s594
        %s596 = sand.u32 %s60, 1
        %s597 = smul.addr %s596, 8
        %s598 = scalar_lea.vmem [#allocation2], %s597
        %p599 = pneg %p73
        %p600 = pneg %p70
        %p601 = pneg %p94
        %p602 = pneg %p91
        %p603 = pneg %p115
        %p604 = pneg %p112
        %p605 = pneg %p136
        %p606 = pneg %p133
        %p607 = pneg %p157
        %p608 = pneg %p154
        %p609 = pneg %p178
        %p610 = pneg %p175
        %p611 = pneg %p199
        %p612 = pneg %p196
        %p613 = pneg %p220
        %p614 = pneg %p217
        %p615 = pneg %p241
        %p616 = pneg %p238
        %p617 = pneg %p262
        %p618 = pneg %p259
        %p619 = pneg %p283
        %p620 = pneg %p280
        %p621 = pneg %p304
        %p622 = pneg %p301
        %p623 = pneg %p325
        %p624 = pneg %p322
        %p625 = pneg %p346
        %p626 = pneg %p343
        %p627 = pneg %p367
        %p628 = pneg %p364
        %p629 = pneg %p388
        %p630 = pneg %p385
        %p631 = pneg %p409
        %p632 = pneg %p406
        %p633 = pneg %p437
        %p634 = pneg %p434
        %s635 = sand.u32 %s424, 1
        %s636 = scalar_lea.sflag [#allocation4], %s635
        %s637 = sand.u32 %s424, 1
        %s638 = smul.addr %s637, 8
        %s639 = scalar_lea.vmem [#allocation8], %s638
        %p640 = pneg %p465
        %p641 = pneg %p462
        %s642 = sand.u32 %s452, 1
        %s643 = scalar_lea.sflag [#allocation10], %s642
        %s644 = sand.u32 %s452, 1
        %s645 = smul.addr %s644, 32
        %s646 = scalar_lea.vmem [#allocation9], %s645
        %v647 = vld [vmem:[%s581] sm:$0xff]
        %s648 = smul.u32 %s45, 8
        %s649 = scalar_lea.vmem %s581, %s648 [#allocation2]
        %v650 = vld [vmem:[%s649] sm:$0xff]
        %v651 = vld [vmem:[%s1] sm:$0xff]
        %v652 = vld [vmem:[%s1 + $0x8] sm:$0xff]
        %v653 = vld [vmem:[%s1 + $0x10] sm:$0xff]
        %v654 = vld [vmem:[%s1 + $0x18] sm:$0xff]
        %v655 = vld [vmem:[%s2] sm:$0x1]
        %v657 = vlaneseq
        %v658 = vshrl.u32 %v657, 7
        %v659 = vsub.s32 0, %v658
        %v660 = vrot.slane %v655, %v659
        %vm662 = vcmask 261120
        %v664 = vsel %vm662, %v650, 0
        %666 = vmatprep.subr.mxu0 0.0
        %667 = vmatpush1.msra.mxu0 %v651
        %668 = vmatprep.subr.mxu0 0.0
        %669 = vmatpush1.msra.mxu0 %v652
        %670 = vmatprep.subr.mxu0 0.0
        %671 = vmatpush1.msra.mxu0 %v653
        %672 = vmatprep.subr.mxu0 0.0
        %673 = vmatpush1.msra.mxu0 %v654
        %674 = vmatprep.subr.mxu0 0.0
        %675 = vmatpush1.msra.mxu0 0.0
        %676 = vmatprep.subr.mxu0 0.0
        %677 = vmatpush1.msra.mxu0 0.0
        %678 = vmatprep.subr.mxu0 0.0
        %679 = vmatpush1.msra.mxu0 0.0
        %680 = vmatprep.subr.mxu0 0.0
        %681 = vmatpush1.msra.mxu0 0.0
        %682 = vmatprep.subr.mxu0 0.0
        %683 = vmatpush1.msra.mxu0 0.0
        %684 = vmatprep.subr.mxu0 0.0
        %685 = vmatpush1.msra.mxu0 0.0
        %686 = vmatprep.subr.mxu0 0.0
        %687 = vmatpush1.msra.mxu0 0.0
        %688 = vmatprep.subr.mxu0 0.0
        %689 = vmatpush1.msra.mxu0 0.0
        %690 = vmatprep.subr.mxu0 0.0
        %691 = vmatpush1.msra.mxu0 0.0
        %692 = vmatprep.subr.mxu0 0.0
        %693 = vmatpush1.msra.mxu0 0.0
        %694 = vmatprep.subr.mxu0 0.0
        %695 = vmatpush1.msra.mxu0 0.0
        %696 = vmatprep.subr.mxu0 0.0
        %697 = vmatpush1.msra.mxu0 0.0
        %698 = vmatprep.subr.mxu0 0.0
        %699 = vmatpush1.msra.mxu0 0.0
        %700 = vmatprep.subr.mxu0 0.0
        %701 = vmatpush1.msra.mxu0 0.0
        %702 = vmatprep.subr.mxu0 0.0
        %703 = vmatpush1.msra.mxu0 0.0
        %704 = vmatprep.subr.mxu0 0.0
        %705 = vmatpush1.msra.mxu0 0.0
        %706 = vmatprep.subr.mxu0 0.0
        %707 = vmatpush1.msra.mxu0 0.0
        %708 = vmatprep.subr.mxu0 0.0
        %709 = vmatpush1.msra.mxu0 0.0
        %710 = vmatprep.subr.mxu0 0.0
        %711 = vmatpush1.msra.mxu0 0.0
        %712 = vmatprep.subr.mxu0 0.0
        %713 = vmatpush1.msra.mxu0 0.0
        %714 = vmatprep.subr.mxu0 0.0
        %715 = vmatpush1.msra.mxu0 0.0
        %716 = vmatprep.subr.mxu0 0.0
        %717 = vmatpush1.msra.mxu0 0.0
        %718 = vmatprep.subr.mxu0 0.0
        %719 = vmatpush1.msra.mxu0 0.0
        %720 = vmatprep.subr.mxu0 0.0
        %721 = vmatpush1.msra.mxu0 0.0
        %722 = vmatprep.subr.mxu0 0.0
        %723 = vmatpush1.msra.mxu0 0.0
        %724 = vmatprep.subr.mxu0 0.0
        %725 = vmatpush1.msra.mxu0 0.0
        %726 = vmatprep.subr.mxu0 0.0
        %727 = vmatpush1.msra.mxu0 0.0
        %728 = vmatprep.subr.mxu0 0.0
        %729 = vmatpush1.msra.mxu0 0.0
        %730 = vmatprep.mubr.f32.mxu0 0.0
        %731 = vmatmul.mubr.f32.gmra.mrb[0].mxu0 %v664
        %v732 = vpop.f32.mrb[0].mxu0
        %v733 = vadd.f32 %v660, %v732
        %v734 = vpop.f32.mrb[0].mxu0
        %735 = vdwg.mxu0
        %v736 = vld [vmem:[%s3] sm:$0xff]
        %v737 = vld [vmem:[%s3 + $0x8] sm:$0xff]
        %v738 = vld [vmem:[%s3 + $0x10] sm:$0xff]
        %v739 = vld [vmem:[%s3 + $0x18] sm:$0xff]
        %v740 = vld [vmem:[%s4] sm:$0x1]
        %v742 = vlaneseq
        %v743 = vshrl.u32 %v742, 7
        %v744 = vsub.s32 0, %v743
        %v745 = vrot.slane %v740, %v744
        %v748 = vsel %vm662, %v647, 0
        %750 = vmatprep.subr.mxu0 0.0
        %751 = vmatpush1.msra.mxu0 %v736
        %752 = vmatprep.subr.mxu0 0.0
        %753 = vmatpush1.msra.mxu0 %v737
        %754 = vmatprep.subr.mxu0 0.0
        %755 = vmatpush1.msra.mxu0 %v738
        %756 = vmatprep.subr.mxu0 0.0
        %757 = vmatpush1.msra.mxu0 %v739
        %758 = vmatprep.subr.mxu0 0.0
        %759 = vmatpush1.msra.mxu0 0.0
        %760 = vmatprep.subr.mxu0 0.0
        %761 = vmatpush1.msra.mxu0 0.0
        %762 = vmatprep.subr.mxu0 0.0
        %763 = vmatpush1.msra.mxu0 0.0
        %764 = vmatprep.subr.mxu0 0.0
        %765 = vmatpush1.msra.mxu0 0.0
        %766 = vmatprep.subr.mxu0 0.0
        %767 = vmatpush1.msra.mxu0 0.0
        %768 = vmatprep.subr.mxu0 0.0
        %769 = vmatpush1.msra.mxu0 0.0
        %770 = vmatprep.subr.mxu0 0.0
        %771 = vmatpush1.msra.mxu0 0.0
        %772 = vmatprep.subr.mxu0 0.0
        %773 = vmatpush1.msra.mxu0 0.0
        %774 = vmatprep.subr.mxu0 0.0
        %775 = vmatpush1.msra.mxu0 0.0
        %776 = vmatprep.subr.mxu0 0.0
        %777 = vmatpush1.msra.mxu0 0.0
        %778 = vmatprep.subr.mxu0 0.0
        %779 = vmatpush1.msra.mxu0 0.0
        %780 = vmatprep.subr.mxu0 0.0
        %781 = vmatpush1.msra.mxu0 0.0
        %782 = vmatprep.subr.mxu0 0.0
        %783 = vmatpush1.msra.mxu0 0.0
        %784 = vmatprep.subr.mxu0 0.0
        %785 = vmatpush1.msra.mxu0 0.0
        %786 = vmatprep.subr.mxu0 0.0
        %787 = vmatpush1.msra.mxu0 0.0
        %788 = vmatprep.subr.mxu0 0.0
        %789 = vmatpush1.msra.mxu0 0.0
        %790 = vmatprep.subr.mxu0 0.0
        %791 = vmatpush1.msra.mxu0 0.0
        %792 = vmatprep.subr.mxu0 0.0
        %793 = vmatpush1.msra.mxu0 0.0
        %794 = vmatprep.subr.mxu0 0.0
        %795 = vmatpush1.msra.mxu0 0.0
        %796 = vmatprep.subr.mxu0 0.0
        %797 = vmatpush1.msra.mxu0 0.0
        %798 = vmatprep.subr.mxu0 0.0
        %799 = vmatpush1.msra.mxu0 0.0
        %800 = vmatprep.subr.mxu0 0.0
        %801 = vmatpush1.msra.mxu0 0.0
        %802 = vmatprep.subr.mxu0 0.0
        %803 = vmatpush1.msra.mxu0 0.0
        %804 = vmatprep.subr.mxu0 0.0
        %805 = vmatpush1.msra.mxu0 0.0
        %806 = vmatprep.subr.mxu0 0.0
        %807 = vmatpush1.msra.mxu0 0.0
        %808 = vmatprep.subr.mxu0 0.0
        %809 = vmatpush1.msra.mxu0 0.0
        %810 = vmatprep.subr.mxu0 0.0
        %811 = vmatpush1.msra.mxu0 0.0
        %812 = vmatprep.subr.mxu0 0.0
        %813 = vmatpush1.msra.mxu0 0.0
        %814 = vmatprep.mubr.f32.mxu0 0.0
        %815 = vmatmul.mubr.f32.gmra.mrb[0].mxu0 %v748
        %v816 = vpop.f32.mrb[0].mxu0
        %v817 = vadd.f32 %v745, %v816
        %v818 = vpop.f32.mrb[0].mxu0
        %819 = vdwg.mxu0
        %v820 = vld [vmem:[%s5] sm:$0xff]
        %v821 = vld [vmem:[%s5 + $0x8] sm:$0xff]
        %v822 = vld [vmem:[%s5 + $0x10] sm:$0xff]
        %v823 = vld [vmem:[%s5 + $0x18] sm:$0xff]
        %v824 = vld [vmem:[%s6] sm:$0x1]
        %v826 = vlaneseq
        %v827 = vshrl.u32 %v826, 7
        %v828 = vsub.s32 0, %v827
        %v829 = vrot.slane %v824, %v828
        %831 = vmatprep.subr.mxu0 0.0
        %832 = vmatpush1.msra.mxu0 %v820
        %833 = vmatprep.subr.mxu0 0.0
        %834 = vmatpush1.msra.mxu0 %v821
        %835 = vmatprep.subr.mxu0 0.0
        %836 = vmatpush1.msra.mxu0 %v822
        %837 = vmatprep.subr.mxu0 0.0
        %838 = vmatpush1.msra.mxu0 %v823
        %839 = vmatprep.subr.mxu0 0.0
        %840 = vmatpush1.msra.mxu0 0.0
        %841 = vmatprep.subr.mxu0 0.0
        %842 = vmatpush1.msra.mxu0 0.0
        %843 = vmatprep.subr.mxu0 0.0
        %844 = vmatpush1.msra.mxu0 0.0
        %845 = vmatprep.subr.mxu0 0.0
        %846 = vmatpush1.msra.mxu0 0.0
        %847 = vmatprep.subr.mxu0 0.0
        %848 = vmatpush1.msra.mxu0 0.0
        %849 = vmatprep.subr.mxu0 0.0
        %850 = vmatpush1.msra.mxu0 0.0
        %851 = vmatprep.subr.mxu0 0.0
        %852 = vmatpush1.msra.mxu0 0.0
        %853 = vmatprep.subr.mxu0 0.0
        %854 = vmatpush1.msra.mxu0 0.0
        %855 = vmatprep.subr.mxu0 0.0
        %856 = vmatpush1.msra.mxu0 0.0
        %857 = vmatprep.subr.mxu0 0.0
        %858 = vmatpush1.msra.mxu0 0.0
        %859 = vmatprep.subr.mxu0 0.0
        %860 = vmatpush1.msra.mxu0 0.0
        %861 = vmatprep.subr.mxu0 0.0
        %862 = vmatpush1.msra.mxu0 0.0
        %863 = vmatprep.subr.mxu0 0.0
        %864 = vmatpush1.msra.mxu0 0.0
        %865 = vmatprep.subr.mxu0 0.0
        %866 = vmatpush1.msra.mxu0 0.0
        %867 = vmatprep.subr.mxu0 0.0
        %868 = vmatpush1.msra.mxu0 0.0
        %869 = vmatprep.subr.mxu0 0.0
        %870 = vmatpush1.msra.mxu0 0.0
        %871 = vmatprep.subr.mxu0 0.0
        %872 = vmatpush1.msra.mxu0 0.0
        %873 = vmatprep.subr.mxu0 0.0
        %874 = vmatpush1.msra.mxu0 0.0
        %875 = vmatprep.subr.mxu0 0.0
        %876 = vmatpush1.msra.mxu0 0.0
        %877 = vmatprep.subr.mxu0 0.0
        %878 = vmatpush1.msra.mxu0 0.0
        %879 = vmatprep.subr.mxu0 0.0
        %880 = vmatpush1.msra.mxu0 0.0
        %881 = vmatprep.subr.mxu0 0.0
        %882 = vmatpush1.msra.mxu0 0.0
        %883 = vmatprep.subr.mxu0 0.0
        %884 = vmatpush1.msra.mxu0 0.0
        %885 = vmatprep.subr.mxu0 0.0
        %886 = vmatpush1.msra.mxu0 0.0
        %887 = vmatprep.subr.mxu0 0.0
        %888 = vmatpush1.msra.mxu0 0.0
        %889 = vmatprep.subr.mxu0 0.0
        %890 = vmatpush1.msra.mxu0 0.0
        %891 = vmatprep.subr.mxu0 0.0
        %892 = vmatpush1.msra.mxu0 0.0
        %893 = vmatprep.subr.mxu0 0.0
        %894 = vmatpush1.msra.mxu0 0.0
        %895 = vmatprep.mubr.f32.mxu0 0.0
        %896 = vmatmul.mubr.f32.gmra.mrb[0].mxu0 %v748
        %v897 = vpop.f32.mrb[0].mxu0
        %v898 = vadd.f32 %v829, %v897
        %v899 = vpop.f32.mrb[0].mxu0
        %900 = vdwg.mxu0
        %v901 = vmul.f32 %v733, 0.35355338
        %903 = vrot.lane.b32.xlu0 %v901, 120
        %v904 = vpop.permute.xlu0 %903
        %906 = vrot.lane.b32.xlu0 %v901, 112
        %v907 = vpop.permute.xlu0 %906
        %909 = vrot.lane.b32.xlu0 %v901, 104
        %v910 = vpop.permute.xlu0 %909
        %v912 = vcombine.low %v901, %v907
        %v913 = vcombine.high %v901, %v907
        %v915 = vunpack.c.l.s4 1983009808
        %v916 = vunpack.c.0.s8 %v915
        %v917 = vlaneseq
        %v918 = vshrl.u32 %v917, 7
        %v919 = vsub.s32 %v916, %v918
        %v920 = vrot.slane %v912, %v919
        %v922 = vunpack.c.l.s4 1983009808
        %v923 = vunpack.c.0.s8 %v922
        %v924 = vlaneseq
        %v925 = vshrl.u32 %v924, 7
        %v926 = vsub.s32 %v923, %v925
        %v927 = vrot.slane %v913, %v926
        %v928 = vcombine.low %v904, %v910
        %v929 = vcombine.high %v904, %v910
        %v931 = vunpack.c.l.s4 1983009808
        %v932 = vunpack.c.0.s8 %v931
        %v933 = vlaneseq
        %v934 = vshrl.u32 %v933, 7
        %v935 = vsub.s32 %v932, %v934
        %v936 = vrot.slane %v928, %v935
        %v938 = vunpack.c.l.s4 1983009808
        %v939 = vunpack.c.0.s8 %v938
        %v940 = vlaneseq
        %v941 = vshrl.u32 %v940, 7
        %v942 = vsub.s32 %v939, %v941
        %v943 = vrot.slane %v929, %v942
        %v944 = vcombine.low %v920, %v936
        %v945 = vcombine.high %v920, %v936
        %v947 = vunpack.c.l.s4 1934713408
        %v948 = vunpack.c.0.s8 %v947
        %v949 = vlaneseq
        %v950 = vshrl.u32 %v949, 7
        %v951 = vsub.s32 %v948, %v950
        %v952 = vrot.slane %v944, %v951
        %v954 = vunpack.c.l.s4 1934713408
        %v955 = vunpack.c.0.s8 %v954
        %v956 = vlaneseq
        %v957 = vshrl.u32 %v956, 7
        %v958 = vsub.s32 %v955, %v957
        %v959 = vrot.slane %v945, %v958
        %v960 = vcombine.low %v927, %v943
        %v961 = vcombine.high %v927, %v943
        %v963 = vunpack.c.l.s4 1934713408
        %v964 = vunpack.c.0.s8 %v963
        %v965 = vlaneseq
        %v966 = vshrl.u32 %v965, 7
        %v967 = vsub.s32 %v964, %v966
        %v968 = vrot.slane %v960, %v967
        %v970 = vunpack.c.l.s4 1934713408
        %v971 = vunpack.c.0.s8 %v970
        %v972 = vlaneseq
        %v973 = vshrl.u32 %v972, 7
        %v974 = vsub.s32 %v971, %v973
        %v975 = vrot.slane %v961, %v974
        %v976 = vcombine.high %v952, 0.0
        %v977 = vcombine.high %v959, 0.0
        %v978 = vcombine.high %v968, 0.0
        %v979 = vcombine.high %v975, 0.0
        %v980 = vcombine.low %v952, %v959
        %v982 = vunpack.c.l.s4 1983009808
        %v983 = vunpack.c.0.s8 %v982
        %v984 = vlaneseq
        %v985 = vshrl.u32 %v984, 7
        %v986 = vsub.s32 %v983, %v985
        %v987 = vrot.slane %v980, %v986
        %v988 = vcombine.low %v976, %v977
        %v990 = vunpack.c.l.s4 1983009808
        %v991 = vunpack.c.0.s8 %v990
        %v992 = vlaneseq
        %v993 = vshrl.u32 %v992, 7
        %v994 = vsub.s32 %v991, %v993
        %v995 = vrot.slane %v988, %v994
        %v996 = vcombine.low %v968, %v975
        %v998 = vunpack.c.l.s4 1983009808
        %v999 = vunpack.c.0.s8 %v998
        %v1000 = vlaneseq
        %v1001 = vshrl.u32 %v1000, 7
        %v1002 = vsub.s32 %v999, %v1001
        %v1003 = vrot.slane %v996, %v1002
        %v1004 = vcombine.low %v978, %v979
        %v1006 = vunpack.c.l.s4 1983009808
        %v1007 = vunpack.c.0.s8 %v1006
        %v1008 = vlaneseq
        %v1009 = vshrl.u32 %v1008, 7
        %v1010 = vsub.s32 %v1007, %v1009
        %v1011 = vrot.slane %v1004, %v1010
        %v1012 = vcombine.low %v987, %v995
        %v1013 = vcombine.high %v987, %v995
        %v1015 = vunpack.c.l.s4 1934713408
        %v1016 = vunpack.c.0.s8 %v1015
        %v1017 = vlaneseq
        %v1018 = vshrl.u32 %v1017, 7
        %v1019 = vsub.s32 %v1016, %v1018
        %v1020 = vrot.slane %v1012, %v1019
        %v1022 = vunpack.c.l.s4 1934713408
        %v1023 = vunpack.c.0.s8 %v1022
        %v1024 = vlaneseq
        %v1025 = vshrl.u32 %v1024, 7
        %v1026 = vsub.s32 %v1023, %v1025
        %v1027 = vrot.slane %v1013, %v1026
        %v1028 = vcombine.low %v1003, %v1011
        %v1029 = vcombine.high %v1003, %v1011
        %v1031 = vunpack.c.l.s4 1934713408
        %v1032 = vunpack.c.0.s8 %v1031
        %v1033 = vlaneseq
        %v1034 = vshrl.u32 %v1033, 7
        %v1035 = vsub.s32 %v1032, %v1034
        %v1036 = vrot.slane %v1028, %v1035
        %v1038 = vunpack.c.l.s4 1934713408
        %v1039 = vunpack.c.0.s8 %v1038
        %v1040 = vlaneseq
        %v1041 = vshrl.u32 %v1040, 7
        %v1042 = vsub.s32 %v1039, %v1041
        %v1043 = vrot.slane %v1029, %v1042
        %v1044 = vcombine.low %v1020, %v1036
        %v1045 = vcombine.high %v1020, %v1036
        %v1046 = vcombine.low %v1027, %v1043
        %v1047 = vcombine.high %v1027, %v1043
        %1049 = vrot.lane.b32.xlu0 %v817, 120
        %v1050 = vpop.permute.xlu0 %1049
        %1052 = vrot.lane.b32.xlu0 %v817, 112
        %v1053 = vpop.permute.xlu0 %1052
        %1055 = vrot.lane.b32.xlu0 %v817, 104
        %v1056 = vpop.permute.xlu0 %1055
        %v1058 = vcombine.low %v817, %v1053
        %v1059 = vcombine.high %v817, %v1053
        %v1061 = vunpack.c.l.s4 1983009808
        %v1062 = vunpack.c.0.s8 %v1061
        %v1063 = vlaneseq
        %v1064 = vshrl.u32 %v1063, 7
        %v1065 = vsub.s32 %v1062, %v1064
        %v1066 = vrot.slane %v1058, %v1065
        %v1068 = vunpack.c.l.s4 1983009808
        %v1069 = vunpack.c.0.s8 %v1068
        %v1070 = vlaneseq
        %v1071 = vshrl.u32 %v1070, 7
        %v1072 = vsub.s32 %v1069, %v1071
        %v1073 = vrot.slane %v1059, %v1072
        %v1074 = vcombine.low %v1050, %v1056
        %v1075 = vcombine.high %v1050, %v1056
        %v1077 = vunpack.c.l.s4 1983009808
        %v1078 = vunpack.c.0.s8 %v1077
        %v1079 = vlaneseq
        %v1080 = vshrl.u32 %v1079, 7
        %v1081 = vsub.s32 %v1078, %v1080
        %v1082 = vrot.slane %v1074, %v1081
        %v1084 = vunpack.c.l.s4 1983009808
        %v1085 = vunpack.c.0.s8 %v1084
        %v1086 = vlaneseq
        %v1087 = vshrl.u32 %v1086, 7
        %v1088 = vsub.s32 %v1085, %v1087
        %v1089 = vrot.slane %v1075, %v1088
        %v1090 = vcombine.low %v1066, %v1082
        %v1091 = vcombine.high %v1066, %v1082
        %v1093 = vunpack.c.l.s4 1934713408
        %v1094 = vunpack.c.0.s8 %v1093
        %v1095 = vlaneseq
        %v1096 = vshrl.u32 %v1095, 7
        %v1097 = vsub.s32 %v1094, %v1096
        %v1098 = vrot.slane %v1090, %v1097
        %v1100 = vunpack.c.l.s4 1934713408
        %v1101 = vunpack.c.0.s8 %v1100
        %v1102 = vlaneseq
        %v1103 = vshrl.u32 %v1102, 7
        %v1104 = vsub.s32 %v1101, %v1103
        %v1105 = vrot.slane %v1091, %v1104
        %v1106 = vcombine.low %v1073, %v1089
        %v1107 = vcombine.high %v1073, %v1089
        %v1109 = vunpack.c.l.s4 1934713408
        %v1110 = vunpack.c.0.s8 %v1109
        %v1111 = vlaneseq
        %v1112 = vshrl.u32 %v1111, 7
        %v1113 = vsub.s32 %v1110, %v1112
        %v1114 = vrot.slane %v1106, %v1113
        %v1116 = vunpack.c.l.s4 1934713408
        %v1117 = vunpack.c.0.s8 %v1116
        %v1118 = vlaneseq
        %v1119 = vshrl.u32 %v1118, 7
        %v1120 = vsub.s32 %v1117, %v1119
        %v1121 = vrot.slane %v1107, %v1120
        %v1122 = vcombine.high %v1098, 0.0
        %v1123 = vcombine.high %v1105, 0.0
        %v1124 = vcombine.high %v1114, 0.0
        %v1125 = vcombine.high %v1121, 0.0
        %v1126 = vcombine.low %v1098, %v1105
        %v1128 = vunpack.c.l.s4 1983009808
        %v1129 = vunpack.c.0.s8 %v1128
        %v1130 = vlaneseq
        %v1131 = vshrl.u32 %v1130, 7
        %v1132 = vsub.s32 %v1129, %v1131
        %v1133 = vrot.slane %v1126, %v1132
        %v1134 = vcombine.low %v1122, %v1123
        %v1136 = vunpack.c.l.s4 1983009808
        %v1137 = vunpack.c.0.s8 %v1136
        %v1138 = vlaneseq
        %v1139 = vshrl.u32 %v1138, 7
        %v1140 = vsub.s32 %v1137, %v1139
        %v1141 = vrot.slane %v1134, %v1140
        %v1142 = vcombine.low %v1114, %v1121
        %v1144 = vunpack.c.l.s4 1983009808
        %v1145 = vunpack.c.0.s8 %v1144
        %v1146 = vlaneseq
        %v1147 = vshrl.u32 %v1146, 7
        %v1148 = vsub.s32 %v1145, %v1147
        %v1149 = vrot.slane %v1142, %v1148
        %v1150 = vcombine.low %v1124, %v1125
        %v1152 = vunpack.c.l.s4 1983009808
        %v1153 = vunpack.c.0.s8 %v1152
        %v1154 = vlaneseq
        %v1155 = vshrl.u32 %v1154, 7
        %v1156 = vsub.s32 %v1153, %v1155
        %v1157 = vrot.slane %v1150, %v1156
        %v1158 = vcombine.low %v1133, %v1141
        %v1159 = vcombine.high %v1133, %v1141
        %v1161 = vunpack.c.l.s4 1934713408
        %v1162 = vunpack.c.0.s8 %v1161
        %v1163 = vlaneseq
        %v1164 = vshrl.u32 %v1163, 7
        %v1165 = vsub.s32 %v1162, %v1164
        %v1166 = vrot.slane %v1158, %v1165
        %v1168 = vunpack.c.l.s4 1934713408
        %v1169 = vunpack.c.0.s8 %v1168
        %v1170 = vlaneseq
        %v1171 = vshrl.u32 %v1170, 7
        %v1172 = vsub.s32 %v1169, %v1171
        %v1173 = vrot.slane %v1159, %v1172
        %v1174 = vcombine.low %v1149, %v1157
        %v1175 = vcombine.high %v1149, %v1157
        %v1177 = vunpack.c.l.s4 1934713408
        %v1178 = vunpack.c.0.s8 %v1177
        %v1179 = vlaneseq
        %v1180 = vshrl.u32 %v1179, 7
        %v1181 = vsub.s32 %v1178, %v1180
        %v1182 = vrot.slane %v1174, %v1181
        %v1184 = vunpack.c.l.s4 1934713408
        %v1185 = vunpack.c.0.s8 %v1184
        %v1186 = vlaneseq
        %v1187 = vshrl.u32 %v1186, 7
        %v1188 = vsub.s32 %v1185, %v1187
        %v1189 = vrot.slane %v1175, %v1188
        %v1190 = vcombine.low %v1166, %v1182
        %v1191 = vcombine.high %v1166, %v1182
        %v1192 = vcombine.low %v1173, %v1189
        %v1193 = vcombine.high %v1173, %v1189
        %1195 = vrot.lane.b32.xlu0 %v898, 120
        %v1196 = vpop.permute.xlu0 %1195
        %1198 = vrot.lane.b32.xlu0 %v898, 112
        %v1199 = vpop.permute.xlu0 %1198
        %1201 = vrot.lane.b32.xlu0 %v898, 104
        %v1202 = vpop.permute.xlu0 %1201
        %v1204 = vcombine.low %v898, %v1199
        %v1205 = vcombine.high %v898, %v1199
        %v1207 = vunpack.c.l.s4 1983009808
        %v1208 = vunpack.c.0.s8 %v1207
        %v1209 = vlaneseq
        %v1210 = vshrl.u32 %v1209, 7
        %v1211 = vsub.s32 %v1208, %v1210
        %v1212 = vrot.slane %v1204, %v1211
        %v1214 = vunpack.c.l.s4 1983009808
        %v1215 = vunpack.c.0.s8 %v1214
        %v1216 = vlaneseq
        %v1217 = vshrl.u32 %v1216, 7
        %v1218 = vsub.s32 %v1215, %v1217
        %v1219 = vrot.slane %v1205, %v1218
        %v1220 = vcombine.low %v1196, %v1202
        %v1221 = vcombine.high %v1196, %v1202
        %v1223 = vunpack.c.l.s4 1983009808
        %v1224 = vunpack.c.0.s8 %v1223
        %v1225 = vlaneseq
        %v1226 = vshrl.u32 %v1225, 7
        %v1227 = vsub.s32 %v1224, %v1226
        %v1228 = vrot.slane %v1220, %v1227
        %v1230 = vunpack.c.l.s4 1983009808
        %v1231 = vunpack.c.0.s8 %v1230
        %v1232 = vlaneseq
        %v1233 = vshrl.u32 %v1232, 7
        %v1234 = vsub.s32 %v1231, %v1233
        %v1235 = vrot.slane %v1221, %v1234
        %v1236 = vcombine.low %v1212, %v1228
        %v1237 = vcombine.high %v1212, %v1228
        %v1239 = vunpack.c.l.s4 1934713408
        %v1240 = vunpack.c.0.s8 %v1239
        %v1241 = vlaneseq
        %v1242 = vshrl.u32 %v1241, 7
        %v1243 = vsub.s32 %v1240, %v1242
        %v1244 = vrot.slane %v1236, %v1243
        %v1246 = vunpack.c.l.s4 1934713408
        %v1247 = vunpack.c.0.s8 %v1246
        %v1248 = vlaneseq
        %v1249 = vshrl.u32 %v1248, 7
        %v1250 = vsub.s32 %v1247, %v1249
        %v1251 = vrot.slane %v1237, %v1250
        %v1252 = vcombine.low %v1219, %v1235
        %v1253 = vcombine.high %v1219, %v1235
        %v1255 = vunpack.c.l.s4 1934713408
        %v1256 = vunpack.c.0.s8 %v1255
        %v1257 = vlaneseq
        %v1258 = vshrl.u32 %v1257, 7
        %v1259 = vsub.s32 %v1256, %v1258
        %v1260 = vrot.slane %v1252, %v1259
        %v1262 = vunpack.c.l.s4 1934713408
        %v1263 = vunpack.c.0.s8 %v1262
        %v1264 = vlaneseq
        %v1265 = vshrl.u32 %v1264, 7
        %v1266 = vsub.s32 %v1263, %v1265
        %v1267 = vrot.slane %v1253, %v1266
        %v1268 = vcombine.high %v1244, 0.0
        %v1269 = vcombine.high %v1251, 0.0
        %v1270 = vcombine.high %v1260, 0.0
        %v1271 = vcombine.high %v1267, 0.0
        %v1272 = vcombine.low %v1244, %v1251
        %v1274 = vunpack.c.l.s4 1983009808
        %v1275 = vunpack.c.0.s8 %v1274
        %v1276 = vlaneseq
        %v1277 = vshrl.u32 %v1276, 7
        %v1278 = vsub.s32 %v1275, %v1277
        %v1279 = vrot.slane %v1272, %v1278
        %v1280 = vcombine.low %v1268, %v1269
        %v1282 = vunpack.c.l.s4 1983009808
        %v1283 = vunpack.c.0.s8 %v1282
        %v1284 = vlaneseq
        %v1285 = vshrl.u32 %v1284, 7
        %v1286 = vsub.s32 %v1283, %v1285
        %v1287 = vrot.slane %v1280, %v1286
        %v1288 = vcombine.low %v1260, %v1267
        %v1290 = vunpack.c.l.s4 1983009808
        %v1291 = vunpack.c.0.s8 %v1290
        %v1292 = vlaneseq
        %v1293 = vshrl.u32 %v1292, 7
        %v1294 = vsub.s32 %v1291, %v1293
        %v1295 = vrot.slane %v1288, %v1294
        %v1296 = vcombine.low %v1270, %v1271
        %v1298 = vunpack.c.l.s4 1983009808
        %v1299 = vunpack.c.0.s8 %v1298
        %v1300 = vlaneseq
        %v1301 = vshrl.u32 %v1300, 7
        %v1302 = vsub.s32 %v1299, %v1301
        %v1303 = vrot.slane %v1296, %v1302
        %v1304 = vcombine.low %v1279, %v1287
        %v1305 = vcombine.high %v1279, %v1287
        %v1307 = vunpack.c.l.s4 1934713408
        %v1308 = vunpack.c.0.s8 %v1307
        %v1309 = vlaneseq
        %v1310 = vshrl.u32 %v1309, 7
        %v1311 = vsub.s32 %v1308, %v1310
        %v1312 = vrot.slane %v1304, %v1311
        %v1314 = vunpack.c.l.s4 1934713408
        %v1315 = vunpack.c.0.s8 %v1314
        %v1316 = vlaneseq
        %v1317 = vshrl.u32 %v1316, 7
        %v1318 = vsub.s32 %v1315, %v1317
        %v1319 = vrot.slane %v1305, %v1318
        %v1320 = vcombine.low %v1295, %v1303
        %v1321 = vcombine.high %v1295, %v1303
        %v1323 = vunpack.c.l.s4 1934713408
        %v1324 = vunpack.c.0.s8 %v1323
        %v1325 = vlaneseq
        %v1326 = vshrl.u32 %v1325, 7
        %v1327 = vsub.s32 %v1324, %v1326
        %v1328 = vrot.slane %v1320, %v1327
        %v1330 = vunpack.c.l.s4 1934713408
        %v1331 = vunpack.c.0.s8 %v1330
        %v1332 = vlaneseq
        %v1333 = vshrl.u32 %v1332, 7
        %v1334 = vsub.s32 %v1331, %v1333
        %v1335 = vrot.slane %v1321, %v1334
        %v1336 = vcombine.low %v1312, %v1328
        %v1337 = vcombine.high %v1312, %v1328
        %v1338 = vcombine.low %v1319, %v1335
        %v1339 = vcombine.high %v1319, %v1335
        %vm1340 = vcmask 64512
        %v1342 = vsel %vm1340, %v1044, 0
        %v1345 = vsel %vm1340, %v1190, 0
        %1347 = vmatprep.subr.mxu0 0.0
        %1348 = vmatpush1.xpose.msra.mxu0 %v1345
        %1349 = vmatprep.subr.mxu0 0.0
        %1350 = vmatpush1.xpose.msra.mxu0 0.0
        %1351 = vmatprep.subr.mxu0 0.0
        %1352 = vmatpush1.xpose.msra.mxu0 0.0
        %1353 = vmatprep.subr.mxu0 0.0
        %1354 = vmatpush1.xpose.msra.mxu0 0.0
        %1355 = vmatprep.subr.mxu0 0.0
        %1356 = vmatpush1.xpose.msra.mxu0 0.0
        %1357 = vmatprep.subr.mxu0 0.0
        %1358 = vmatpush1.xpose.msra.mxu0 0.0
        %1359 = vmatprep.subr.mxu0 0.0
        %1360 = vmatpush1.xpose.msra.mxu0 0.0
        %1361 = vmatprep.subr.mxu0 0.0
        %1362 = vmatpush1.xpose.msra.mxu0 0.0
        %1363 = vmatprep.subr.mxu0 0.0
        %1364 = vmatpush1.xpose.msra.mxu0 0.0
        %1365 = vmatprep.subr.mxu0 0.0
        %1366 = vmatpush1.xpose.msra.mxu0 0.0
        %1367 = vmatprep.subr.mxu0 0.0
        %1368 = vmatpush1.xpose.msra.mxu0 0.0
        %1369 = vmatprep.subr.mxu0 0.0
        %1370 = vmatpush1.xpose.msra.mxu0 0.0
        %1371 = vmatprep.subr.mxu0 0.0
        %1372 = vmatpush1.xpose.msra.mxu0 0.0
        %1373 = vmatprep.subr.mxu0 0.0
        %1374 = vmatpush1.xpose.msra.mxu0 0.0
        %1375 = vmatprep.subr.mxu0 0.0
        %1376 = vmatpush1.xpose.msra.mxu0 0.0
        %1377 = vmatprep.subr.mxu0 0.0
        %1378 = vmatpush1.xpose.msra.mxu0 0.0
        %1379 = vmatprep.subr.mxu0 0.0
        %1380 = vmatpush1.xpose.msra.mxu0 0.0
        %1381 = vmatprep.subr.mxu0 0.0
        %1382 = vmatpush1.xpose.msra.mxu0 0.0
        %1383 = vmatprep.subr.mxu0 0.0
        %1384 = vmatpush1.xpose.msra.mxu0 0.0
        %1385 = vmatprep.subr.mxu0 0.0
        %1386 = vmatpush1.xpose.msra.mxu0 0.0
        %1387 = vmatprep.subr.mxu0 0.0
        %1388 = vmatpush1.xpose.msra.mxu0 0.0
        %1389 = vmatprep.subr.mxu0 0.0
        %1390 = vmatpush1.xpose.msra.mxu0 0.0
        %1391 = vmatprep.subr.mxu0 0.0
        %1392 = vmatpush1.xpose.msra.mxu0 0.0
        %1393 = vmatprep.subr.mxu0 0.0
        %1394 = vmatpush1.xpose.msra.mxu0 0.0
        %1395 = vmatprep.subr.mxu0 0.0
        %1396 = vmatpush1.xpose.msra.mxu0 0.0
        %1397 = vmatprep.subr.mxu0 0.0
        %1398 = vmatpush1.xpose.msra.mxu0 0.0
        %1399 = vmatprep.subr.mxu0 0.0
        %1400 = vmatpush1.xpose.msra.mxu0 0.0
        %1401 = vmatprep.subr.mxu0 0.0
        %1402 = vmatpush1.xpose.msra.mxu0 0.0
        %1403 = vmatprep.subr.mxu0 0.0
        %1404 = vmatpush1.xpose.msra.mxu0 0.0
        %1405 = vmatprep.subr.mxu0 0.0
        %1406 = vmatpush1.xpose.msra.mxu0 0.0
        %1407 = vmatprep.subr.mxu0 0.0
        %1408 = vmatpush1.xpose.msra.mxu0 0.0
        %1409 = vmatprep.subr.mxu0 0.0
        %1410 = vmatpush1.xpose.msra.mxu0 0.0
        %1411 = vmatprep.mubr.f32.mxu0 0.0
        %1412 = vmatmul.mubr.f32.gmra.mrb[0].mxu0 %v1342
        %v1413 = vpop.f32.mrb[0].mxu0
        %v1414 = vadd.f32 0.0, %v1413
        %v1415 = vpop.f32.mrb[0].mxu0
        %1416 = vdwg.mxu0
        %v1418 = vsel %vm1340, %v1045, 0
        %v1421 = vsel %vm1340, %v1191, 0
        %1423 = vmatprep.subr.mxu0 0.0
        %1424 = vmatpush1.xpose.msra.mxu0 %v1421
        %1425 = vmatprep.subr.mxu0 0.0
        %1426 = vmatpush1.xpose.msra.mxu0 0.0
        %1427 = vmatprep.subr.mxu0 0.0
        %1428 = vmatpush1.xpose.msra.mxu0 0.0
        %1429 = vmatprep.subr.mxu0 0.0
        %1430 = vmatpush1.xpose.msra.mxu0 0.0
        %1431 = vmatprep.subr.mxu0 0.0
        %1432 = vmatpush1.xpose.msra.mxu0 0.0
        %1433 = vmatprep.subr.mxu0 0.0
        %1434 = vmatpush1.xpose.msra.mxu0 0.0
        %1435 = vmatprep.subr.mxu0 0.0
        %1436 = vmatpush1.xpose.msra.mxu0 0.0
        %1437 = vmatprep.subr.mxu0 0.0
        %1438 = vmatpush1.xpose.msra.mxu0 0.0
        %1439 = vmatprep.subr.mxu0 0.0
        %1440 = vmatpush1.xpose.msra.mxu0 0.0
        %1441 = vmatprep.subr.mxu0 0.0
        %1442 = vmatpush1.xpose.msra.mxu0 0.0
        %1443 = vmatprep.subr.mxu0 0.0
        %1444 = vmatpush1.xpose.msra.mxu0 0.0
        %1445 = vmatprep.subr.mxu0 0.0
        %1446 = vmatpush1.xpose.msra.mxu0 0.0
        %1447 = vmatprep.subr.mxu0 0.0
        %1448 = vmatpush1.xpose.msra.mxu0 0.0
        %1449 = vmatprep.subr.mxu0 0.0
        %1450 = vmatpush1.xpose.msra.mxu0 0.0
        %1451 = vmatprep.subr.mxu0 0.0
        %1452 = vmatpush1.xpose.msra.mxu0 0.0
        %1453 = vmatprep.subr.mxu0 0.0
        %1454 = vmatpush1.xpose.msra.mxu0 0.0
        %1455 = vmatprep.subr.mxu0 0.0
        %1456 = vmatpush1.xpose.msra.mxu0 0.0
        %1457 = vmatprep.subr.mxu0 0.0
        %1458 = vmatpush1.xpose.msra.mxu0 0.0
        %1459 = vmatprep.subr.mxu0 0.0
        %1460 = vmatpush1.xpose.msra.mxu0 0.0
        %1461 = vmatprep.subr.mxu0 0.0
        %1462 = vmatpush1.xpose.msra.mxu0 0.0
        %1463 = vmatprep.subr.mxu0 0.0
        %1464 = vmatpush1.xpose.msra.mxu0 0.0
        %1465 = vmatprep.subr.mxu0 0.0
        %1466 = vmatpush1.xpose.msra.mxu0 0.0
        %1467 = vmatprep.subr.mxu0 0.0
        %1468 = vmatpush1.xpose.msra.mxu0 0.0
        %1469 = vmatprep.subr.mxu0 0.0
        %1470 = vmatpush1.xpose.msra.mxu0 0.0
        %1471 = vmatprep.subr.mxu0 0.0
        %1472 = vmatpush1.xpose.msra.mxu0 0.0
        %1473 = vmatprep.subr.mxu0 0.0
        %1474 = vmatpush1.xpose.msra.mxu0 0.0
        %1475 = vmatprep.subr.mxu0 0.0
        %1476 = vmatpush1.xpose.msra.mxu0 0.0
        %1477 = vmatprep.subr.mxu0 0.0
        %1478 = vmatpush1.xpose.msra.mxu0 0.0
        %1479 = vmatprep.subr.mxu0 0.0
        %1480 = vmatpush1.xpose.msra.mxu0 0.0
        %1481 = vmatprep.subr.mxu0 0.0
        %1482 = vmatpush1.xpose.msra.mxu0 0.0
        %1483 = vmatprep.subr.mxu0 0.0
        %1484 = vmatpush1.xpose.msra.mxu0 0.0
        %1485 = vmatprep.subr.mxu0 0.0
        %1486 = vmatpush1.xpose.msra.mxu0 0.0
        %1487 = vmatprep.mubr.f32.mxu0 0.0
        %1488 = vmatmul.mubr.f32.gmra.mrb[0].mxu0 %v1418
        %v1489 = vpop.f32.mrb[0].mxu0
        %v1490 = vadd.f32 0.0, %v1489
        %v1491 = vpop.f32.mrb[0].mxu0
        %1492 = vdwg.mxu0
        %v1494 = vsel %vm1340, %v1046, 0
        %v1497 = vsel %vm1340, %v1192, 0
        %1499 = vmatprep.subr.mxu0 0.0
        %1500 = vmatpush1.xpose.msra.mxu0 %v1497
        %1501 = vmatprep.subr.mxu0 0.0
        %1502 = vmatpush1.xpose.msra.mxu0 0.0
        %1503 = vmatprep.subr.mxu0 0.0
        %1504 = vmatpush1.xpose.msra.mxu0 0.0
        %1505 = vmatprep.subr.mxu0 0.0
        %1506 = vmatpush1.xpose.msra.mxu0 0.0
        %1507 = vmatprep.subr.mxu0 0.0
        %1508 = vmatpush1.xpose.msra.mxu0 0.0
        %1509 = vmatprep.subr.mxu0 0.0
        %1510 = vmatpush1.xpose.msra.mxu0 0.0
        %1511 = vmatprep.subr.mxu0 0.0
        %1512 = vmatpush1.xpose.msra.mxu0 0.0
        %1513 = vmatprep.subr.mxu0 0.0
        %1514 = vmatpush1.xpose.msra.mxu0 0.0
        %1515 = vmatprep.subr.mxu0 0.0
        %1516 = vmatpush1.xpose.msra.mxu0 0.0
        %1517 = vmatprep.subr.mxu0 0.0
        %1518 = vmatpush1.xpose.msra.mxu0 0.0
        %1519 = vmatprep.subr.mxu0 0.0
        %1520 = vmatpush1.xpose.msra.mxu0 0.0
        %1521 = vmatprep.subr.mxu0 0.0
        %1522 = vmatpush1.xpose.msra.mxu0 0.0
        %1523 = vmatprep.subr.mxu0 0.0
        %1524 = vmatpush1.xpose.msra.mxu0 0.0
        %1525 = vmatprep.subr.mxu0 0.0
        %1526 = vmatpush1.xpose.msra.mxu0 0.0
        %1527 = vmatprep.subr.mxu0 0.0
        %1528 = vmatpush1.xpose.msra.mxu0 0.0
        %1529 = vmatprep.subr.mxu0 0.0
        %1530 = vmatpush1.xpose.msra.mxu0 0.0
        %1531 = vmatprep.subr.mxu0 0.0
        %1532 = vmatpush1.xpose.msra.mxu0 0.0
        %1533 = vmatprep.subr.mxu0 0.0
        %1534 = vmatpush1.xpose.msra.mxu0 0.0
        %1535 = vmatprep.subr.mxu0 0.0
        %1536 = vmatpush1.xpose.msra.mxu0 0.0
        %1537 = vmatprep.subr.mxu0 0.0
        %1538 = vmatpush1.xpose.msra.mxu0 0.0
        %1539 = vmatprep.subr.mxu0 0.0
        %1540 = vmatpush1.xpose.msra.mxu0 0.0
        %1541 = vmatprep.subr.mxu0 0.0
        %1542 = vmatpush1.xpose.msra.mxu0 0.0
        %1543 = vmatprep.subr.mxu0 0.0
        %1544 = vmatpush1.xpose.msra.mxu0 0.0
        %1545 = vmatprep.subr.mxu0 0.0
        %1546 = vmatpush1.xpose.msra.mxu0 0.0
        %1547 = vmatprep.subr.mxu0 0.0
        %1548 = vmatpush1.xpose.msra.mxu0 0.0
        %1549 = vmatprep.subr.mxu0 0.0
        %1550 = vmatpush1.xpose.msra.mxu0 0.0
        %1551 = vmatprep.subr.mxu0 0.0
        %1552 = vmatpush1.xpose.msra.mxu0 0.0
        %1553 = vmatprep.subr.mxu0 0.0
        %1554 = vmatpush1.xpose.msra.mxu0 0.0
        %1555 = vmatprep.subr.mxu0 0.0
        %1556 = vmatpush1.xpose.msra.mxu0 0.0
        %1557 = vmatprep.subr.mxu0 0.0
        %1558 = vmatpush1.xpose.msra.mxu0 0.0
        %1559 = vmatprep.subr.mxu0 0.0
        %1560 = vmatpush1.xpose.msra.mxu0 0.0
        %1561 = vmatprep.subr.mxu0 0.0
        %1562 = vmatpush1.xpose.msra.mxu0 0.0
        %1563 = vmatprep.mubr.f32.mxu0 0.0
        %1564 = vmatmul.mubr.f32.gmra.mrb[0].mxu0 %v1494
        %v1565 = vpop.f32.mrb[0].mxu0
        %v1566 = vadd.f32 0.0, %v1565
        %v1567 = vpop.f32.mrb[0].mxu0
        %1568 = vdwg.mxu0
        %v1570 = vsel %vm1340, %v1047, 0
        %v1573 = vsel %vm1340, %v1193, 0
        %1575 = vmatprep.subr.mxu0 0.0
        %1576 = vmatpush1.xpose.msra.mxu0 %v1573
        %1577 = vmatprep.subr.mxu0 0.0
        %1578 = vmatpush1.xpose.msra.mxu0 0.0
        %1579 = vmatprep.subr.mxu0 0.0
        %1580 = vmatpush1.xpose.msra.mxu0 0.0
        %1581 = vmatprep.subr.mxu0 0.0
        %1582 = vmatpush1.xpose.msra.mxu0 0.0
        %1583 = vmatprep.subr.mxu0 0.0
        %1584 = vmatpush1.xpose.msra.mxu0 0.0
        %1585 = vmatprep.subr.mxu0 0.0
        %1586 = vmatpush1.xpose.msra.mxu0 0.0
        %1587 = vmatprep.subr.mxu0 0.0
        %1588 = vmatpush1.xpose.msra.mxu0 0.0
        %1589 = vmatprep.subr.mxu0 0.0
        %1590 = vmatpush1.xpose.msra.mxu0 0.0
        %1591 = vmatprep.subr.mxu0 0.0
        %1592 = vmatpush1.xpose.msra.mxu0 0.0
        %1593 = vmatprep.subr.mxu0 0.0
        %1594 = vmatpush1.xpose.msra.mxu0 0.0
        %1595 = vmatprep.subr.mxu0 0.0
        %1596 = vmatpush1.xpose.msra.mxu0 0.0
        %1597 = vmatprep.subr.mxu0 0.0
        %1598 = vmatpush1.xpose.msra.mxu0 0.0
        %1599 = vmatprep.subr.mxu0 0.0
        %1600 = vmatpush1.xpose.msra.mxu0 0.0
        %1601 = vmatprep.subr.mxu0 0.0
        %1602 = vmatpush1.xpose.msra.mxu0 0.0
        %1603 = vmatprep.subr.mxu0 0.0
        %1604 = vmatpush1.xpose.msra.mxu0 0.0
        %1605 = vmatprep.subr.mxu0 0.0
        %1606 = vmatpush1.xpose.msra.mxu0 0.0
        %1607 = vmatprep.subr.mxu0 0.0
        %1608 = vmatpush1.xpose.msra.mxu0 0.0
        %1609 = vmatprep.subr.mxu0 0.0
        %1610 = vmatpush1.xpose.msra.mxu0 0.0
        %1611 = vmatprep.subr.mxu0 0.0
        %1612 = vmatpush1.xpose.msra.mxu0 0.0
        %1613 = vmatprep.subr.mxu0 0.0
        %1614 = vmatpush1.xpose.msra.mxu0 0.0
        %1615 = vmatprep.subr.mxu0 0.0
        %1616 = vmatpush1.xpose.msra.mxu0 0.0
        %1617 = vmatprep.subr.mxu0 0.0
        %1618 = vmatpush1.xpose.msra.mxu0 0.0
        %1619 = vmatprep.subr.mxu0 0.0
        %1620 = vmatpush1.xpose.msra.mxu0 0.0
        %1621 = vmatprep.subr.mxu0 0.0
        %1622 = vmatpush1.xpose.msra.mxu0 0.0
        %1623 = vmatprep.subr.mxu0 0.0
        %1624 = vmatpush1.xpose.msra.mxu0 0.0
        %1625 = vmatprep.subr.mxu0 0.0
        %1626 = vmatpush1.xpose.msra.mxu0 0.0
        %1627 = vmatprep.subr.mxu0 0.0
        %1628 = vmatpush1.xpose.msra.mxu0 0.0
        %1629 = vmatprep.subr.mxu0 0.0
        %1630 = vmatpush1.xpose.msra.mxu0 0.0
        %1631 = vmatprep.subr.mxu0 0.0
        %1632 = vmatpush1.xpose.msra.mxu0 0.0
        %1633 = vmatprep.subr.mxu0 0.0
        %1634 = vmatpush1.xpose.msra.mxu0 0.0
        %1635 = vmatprep.subr.mxu0 0.0
        %1636 = vmatpush1.xpose.msra.mxu0 0.0
        %1637 = vmatprep.subr.mxu0 0.0
        %1638 = vmatpush1.xpose.msra.mxu0 0.0
        %1639 = vmatprep.mubr.f32.mxu0 0.0
        %1640 = vmatmul.mubr.f32.gmra.mrb[0].mxu0 %v1570
        %v1641 = vpop.f32.mrb[0].mxu0
        %v1642 = vadd.f32 0.0, %v1641
        %v1643 = vpop.f32.mrb[0].mxu0
        %1644 = vdwg.mxu0
        %v1645 = vsel %vm1340, %v1414, -inf
        %1646 = vmax.xlane.f32.xlu0 %v1645
        %v1647 = vpop.xlane.xlu0 %1646
        %v1648 = vsel %vm1340, %v1490, -inf
        %1649 = vmax.xlane.f32.xlu0 %v1648
        %v1650 = vpop.xlane.xlu0 %1649
        %v1651 = vsel %vm1340, %v1566, -inf
        %1652 = vmax.xlane.f32.xlu0 %v1651
        %v1653 = vpop.xlane.xlu0 %1652
        %v1654 = vsel %vm1340, %v1642, -inf
        %1655 = vmax.xlane.f32.xlu0 %v1654
        %v1656 = vpop.xlane.xlu0 %1655
        %v1657 = vsub.f32 %v1414, %v1647
        %v1658 = vsub.f32 %v1490, %v1650
        %v1659 = vsub.f32 %v1566, %v1653
        %v1660 = vsub.f32 %v1642, %v1656
        %v1661 = vmul.f32 %v1657, 1.442695
        %v1662 = vpow.pop %v1661
        %v1663 = vmul.f32 %v1658, 1.442695
        %v1664 = vpow.pop %v1663
        %v1665 = vmul.f32 %v1659, 1.442695
        %v1666 = vpow.pop %v1665
        %v1667 = vmul.f32 %v1660, 1.442695
        %v1668 = vpow.pop %v1667
        %v1669 = vsel %vm1340, %v1662, 0.0
        %1670 = vadd.xlane.f32.xlu0 %v1669
        %v1671 = vpop.xlane.xlu0 %1670
        %v1672 = vsel %vm1340, %v1664, 0.0
        %1673 = vadd.xlane.f32.xlu0 %v1672
        %v1674 = vpop.xlane.xlu0 %1673
        %v1675 = vsel %vm1340, %v1666, 0.0
        %1676 = vadd.xlane.f32.xlu0 %v1675
        %v1677 = vpop.xlane.xlu0 %1676
        %v1678 = vsel %vm1340, %v1668, 0.0
        %1679 = vadd.xlane.f32.xlu0 %v1678
        %v1680 = vpop.xlane.xlu0 %1679
        %v1681 = vrcp.pop %v1671
        %v1682 = vmul.f32 %v1662, %v1681
        %v1683 = vrcp.pop %v1674
        %v1684 = vmul.f32 %v1664, %v1683
        %v1685 = vrcp.pop %v1677
        %v1686 = vmul.f32 %v1666, %v1685
        %v1687 = vrcp.pop %v1680
        %v1688 = vmul.f32 %v1668, %v1687
        %1689 = vst.msk [vmem:[%s646] sm:$0xff] %vm1340, %v1682
        %1690 = vst.msk [vmem:[%s646 + $0x8] sm:$0xff] %vm1340, %v1684
        %1691 = vst.msk [vmem:[%s646 + $0x10] sm:$0xff] %vm1340, %v1686
        %1692 = vst.msk [vmem:[%s646 + $0x18] sm:$0xff] %vm1340, %v1688
        %v1694 = vsel %vm1340, %v1682, 0
        %1696 = vmatprep.subr.mxu0 0.0
        %1697 = vmatpush1.msra.mxu0 %v1336
        %1698 = vmatprep.subr.mxu0 0.0
        %1699 = vmatpush1.msra.mxu0 0.0
        %1700 = vmatprep.subr.mxu0 0.0
        %1701 = vmatpush1.msra.mxu0 0.0
        %1702 = vmatprep.subr.mxu0 0.0
        %1703 = vmatpush1.msra.mxu0 0.0
        %1704 = vmatprep.subr.mxu0 0.0
        %1705 = vmatpush1.msra.mxu0 0.0
        %1706 = vmatprep.subr.mxu0 0.0
        %1707 = vmatpush1.msra.mxu0 0.0
        %1708 = vmatprep.subr.mxu0 0.0
        %1709 = vmatpush1.msra.mxu0 0.0
        %1710 = vmatprep.subr.mxu0 0.0
        %1711 = vmatpush1.msra.mxu0 0.0
        %1712 = vmatprep.subr.mxu0 0.0
        %1713 = vmatpush1.msra.mxu0 0.0
        %1714 = vmatprep.subr.mxu0 0.0
        %1715 = vmatpush1.msra.mxu0 0.0
        %1716 = vmatprep.subr.mxu0 0.0
        %1717 = vmatpush1.msra.mxu0 0.0
        %1718 = vmatprep.subr.mxu0 0.0
        %1719 = vmatpush1.msra.mxu0 0.0
        %1720 = vmatprep.subr.mxu0 0.0
        %1721 = vmatpush1.msra.mxu0 0.0
        %1722 = vmatprep.subr.mxu0 0.0
        %1723 = vmatpush1.msra.mxu0 0.0
        %1724 = vmatprep.subr.mxu0 0.0
        %1725 = vmatpush1.msra.mxu0 0.0
        %1726 = vmatprep.subr.mxu0 0.0
        %1727 = vmatpush1.msra.mxu0 0.0
        %1728 = vmatprep.subr.mxu0 0.0
        %1729 = vmatpush1.msra.mxu0 0.0
        %1730 = vmatprep.subr.mxu0 0.0
        %1731 = vmatpush1.msra.mxu0 0.0
        %1732 = vmatprep.subr.mxu0 0.0
        %1733 = vmatpush1.msra.mxu0 0.0
        %1734 = vmatprep.subr.mxu0 0.0
        %1735 = vmatpush1.msra.mxu0 0.0
        %1736 = vmatprep.subr.mxu0 0.0
        %1737 = vmatpush1.msra.mxu0 0.0
        %1738 = vmatprep.subr.mxu0 0.0
        %1739 = vmatpush1.msra.mxu0 0.0
        %1740 = vmatprep.subr.mxu0 0.0
        %1741 = vmatpush1.msra.mxu0 0.0
        %1742 = vmatprep.subr.mxu0 0.0
        %1743 = vmatpush1.msra.mxu0 0.0
        %1744 = vmatprep.subr.mxu0 0.0
        %1745 = vmatpush1.msra.mxu0 0.0
        %1746 = vmatprep.subr.mxu0 0.0
        %1747 = vmatpush1.msra.mxu0 0.0
        %1748 = vmatprep.subr.mxu0 0.0
        %1749 = vmatpush1.msra.mxu0 0.0
        %1750 = vmatprep.subr.mxu0 0.0
        %1751 = vmatpush1.msra.mxu0 0.0
        %1752 = vmatprep.subr.mxu0 0.0
        %1753 = vmatpush1.msra.mxu0 0.0
        %1754 = vmatprep.subr.mxu0 0.0
        %1755 = vmatpush1.msra.mxu0 0.0
        %1756 = vmatprep.subr.mxu0 0.0
        %1757 = vmatpush1.msra.mxu0 0.0
        %1758 = vmatprep.subr.mxu0 0.0
        %1759 = vmatpush1.msra.mxu0 0.0
        %1760 = vmatprep.mubr.f32.mxu0 0.0
        %1761 = vmatmul.mubr.f32.gmra.mrb[0].mxu0 %v1694
        %v1762 = vpop.f32.mrb[0].mxu0
        %v1763 = vadd.f32 0.0, %v1762
        %v1764 = vpop.f32.mrb[0].mxu0
        %1765 = vdwg.mxu0
        %v1767 = vsel %vm1340, %v1684, 0
        %1769 = vmatprep.subr.mxu0 0.0
        %1770 = vmatpush1.msra.mxu0 %v1337
        %1771 = vmatprep.subr.mxu0 0.0
        %1772 = vmatpush1.msra.mxu0 0.0
        %1773 = vmatprep.subr.mxu0 0.0
        %1774 = vmatpush1.msra.mxu0 0.0
        %1775 = vmatprep.subr.mxu0 0.0
        %1776 = vmatpush1.msra.mxu0 0.0
        %1777 = vmatprep.subr.mxu0 0.0
        %1778 = vmatpush1.msra.mxu0 0.0
        %1779 = vmatprep.subr.mxu0 0.0
        %1780 = vmatpush1.msra.mxu0 0.0
        %1781 = vmatprep.subr.mxu0 0.0
        %1782 = vmatpush1.msra.mxu0 0.0
        %1783 = vmatprep.subr.mxu0 0.0
        %1784 = vmatpush1.msra.mxu0 0.0
        %1785 = vmatprep.subr.mxu0 0.0
        %1786 = vmatpush1.msra.mxu0 0.0
        %1787 = vmatprep.subr.mxu0 0.0
        %1788 = vmatpush1.msra.mxu0 0.0
        %1789 = vmatprep.subr.mxu0 0.0
        %1790 = vmatpush1.msra.mxu0 0.0
        %1791 = vmatprep.subr.mxu0 0.0
        %1792 = vmatpush1.msra.mxu0 0.0
        %1793 = vmatprep.subr.mxu0 0.0
        %1794 = vmatpush1.msra.mxu0 0.0
        %1795 = vmatprep.subr.mxu0 0.0
        %1796 = vmatpush1.msra.mxu0 0.0
        %1797 = vmatprep.subr.mxu0 0.0
        %1798 = vmatpush1.msra.mxu0 0.0
        %1799 = vmatprep.subr.mxu0 0.0
        %1800 = vmatpush1.msra.mxu0 0.0
        %1801 = vmatprep.subr.mxu0 0.0
        %1802 = vmatpush1.msra.mxu0 0.0
        %1803 = vmatprep.subr.mxu0 0.0
        %1804 = vmatpush1.msra.mxu0 0.0
        %1805 = vmatprep.subr.mxu0 0.0
        %1806 = vmatpush1.msra.mxu0 0.0
        %1807 = vmatprep.subr.mxu0 0.0
        %1808 = vmatpush1.msra.mxu0 0.0
        %1809 = vmatprep.subr.mxu0 0.0
        %1810 = vmatpush1.msra.mxu0 0.0
        %1811 = vmatprep.subr.mxu0 0.0
        %1812 = vmatpush1.msra.mxu0 0.0
        %1813 = vmatprep.subr.mxu0 0.0
        %1814 = vmatpush1.msra.mxu0 0.0
        %1815 = vmatprep.subr.mxu0 0.0
        %1816 = vmatpush1.msra.mxu0 0.0
        %1817 = vmatprep.subr.mxu0 0.0
        %1818 = vmatpush1.msra.mxu0 0.0
        %1819 = vmatprep.subr.mxu0 0.0
        %1820 = vmatpush1.msra.mxu0 0.0
        %1821 = vmatprep.subr.mxu0 0.0
        %1822 = vmatpush1.msra.mxu0 0.0
        %1823 = vmatprep.subr.mxu0 0.0
        %1824 = vmatpush1.msra.mxu0 0.0
        %1825 = vmatprep.subr.mxu0 0.0
        %1826 = vmatpush1.msra.mxu0 0.0
        %1827 = vmatprep.subr.mxu0 0.0
        %1828 = vmatpush1.msra.mxu0 0.0
        %1829 = vmatprep.subr.mxu0 0.0
        %1830 = vmatpush1.msra.mxu0 0.0
        %1831 = vmatprep.subr.mxu0 0.0
        %1832 = vmatpush1.msra.mxu0 0.0
        %1833 = vmatprep.mubr.f32.mxu0 0.0
        %1834 = vmatmul.mubr.f32.gmra.mrb[0].mxu0 %v1767
        %v1835 = vpop.f32.mrb[0].mxu0
        %v1836 = vadd.f32 0.0, %v1835
        %v1837 = vpop.f32.mrb[0].mxu0
        %1838 = vdwg.mxu0
        %v1840 = vsel %vm1340, %v1686, 0
        %1842 = vmatprep.subr.mxu0 0.0
        %1843 = vmatpush1.msra.mxu0 %v1338
        %1844 = vmatprep.subr.mxu0 0.0
        %1845 = vmatpush1.msra.mxu0 0.0
        %1846 = vmatprep.subr.mxu0 0.0
        %1847 = vmatpush1.msra.mxu0 0.0
        %1848 = vmatprep.subr.mxu0 0.0
        %1849 = vmatpush1.msra.mxu0 0.0
        %1850 = vmatprep.subr.mxu0 0.0
        %1851 = vmatpush1.msra.mxu0 0.0
        %1852 = vmatprep.subr.mxu0 0.0
        %1853 = vmatpush1.msra.mxu0 0.0
        %1854 = vmatprep.subr.mxu0 0.0
        %1855 = vmatpush1.msra.mxu0 0.0
        %1856 = vmatprep.subr.mxu0 0.0
        %1857 = vmatpush1.msra.mxu0 0.0
        %1858 = vmatprep.subr.mxu0 0.0
        %1859 = vmatpush1.msra.mxu0 0.0
        %1860 = vmatprep.subr.mxu0 0.0
        %1861 = vmatpush1.msra.mxu0 0.0
        %1862 = vmatprep.subr.mxu0 0.0
        %1863 = vmatpush1.msra.mxu0 0.0
        %1864 = vmatprep.subr.mxu0 0.0
        %1865 = vmatpush1.msra.mxu0 0.0
        %1866 = vmatprep.subr.mxu0 0.0
        %1867 = vmatpush1.msra.mxu0 0.0
        %1868 = vmatprep.subr.mxu0 0.0
        %1869 = vmatpush1.msra.mxu0 0.0
        %1870 = vmatprep.subr.mxu0 0.0
        %1871 = vmatpush1.msra.mxu0 0.0
        %1872 = vmatprep.subr.mxu0 0.0
        %1873 = vmatpush1.msra.mxu0 0.0
        %1874 = vmatprep.subr.mxu0 0.0
        %1875 = vmatpush1.msra.mxu0 0.0
        %1876 = vmatprep.subr.mxu0 0.0
        %1877 = vmatpush1.msra.mxu0 0.0
        %1878 = vmatprep.subr.mxu0 0.0
        %1879 = vmatpush1.msra.mxu0 0.0
        %1880 = vmatprep.subr.mxu0 0.0
        %1881 = vmatpush1.msra.mxu0 0.0
        %1882 = vmatprep.subr.mxu0 0.0
        %1883 = vmatpush1.msra.mxu0 0.0
        %1884 = vmatprep.subr.mxu0 0.0
        %1885 = vmatpush1.msra.mxu0 0.0
        %1886 = vmatprep.subr.mxu0 0.0
        %1887 = vmatpush1.msra.mxu0 0.0
        %1888 = vmatprep.subr.mxu0 0.0
        %1889 = vmatpush1.msra.mxu0 0.0
        %1890 = vmatprep.subr.mxu0 0.0
        %1891 = vmatpush1.msra.mxu0 0.0
        %1892 = vmatprep.subr.mxu0 0.0
        %1893 = vmatpush1.msra.mxu0 0.0
        %1894 = vmatprep.subr.mxu0 0.0
        %1895 = vmatpush1.msra.mxu0 0.0
        %1896 = vmatprep.subr.mxu0 0.0
        %1897 = vmatpush1.msra.mxu0 0.0
        %1898 = vmatprep.subr.mxu0 0.0
        %1899 = vmatpush1.msra.mxu0 0.0
        %1900 = vmatprep.subr.mxu0 0.0
        %1901 = vmatpush1.msra.mxu0 0.0
        %1902 = vmatprep.subr.mxu0 0.0
        %1903 = vmatpush1.msra.mxu0 0.0
        %1904 = vmatprep.subr.mxu0 0.0
        %1905 = vmatpush1.msra.mxu0 0.0
        %1906 = vmatprep.mubr.f32.mxu0 0.0
        %1907 = vmatmul.mubr.f32.gmra.mrb[0].mxu0 %v1840
        %v1908 = vpop.f32.mrb[0].mxu0
        %v1909 = vadd.f32 0.0, %v1908
        %v1910 = vpop.f32.mrb[0].mxu0
        %1911 = vdwg.mxu0
        %v1913 = vsel %vm1340, %v1688, 0
        %1915 = vmatprep.subr.mxu0 0.0
        %1916 = vmatpush1.msra.mxu0 %v1339
        %1917 = vmatprep.subr.mxu0 0.0
        %1918 = vmatpush1.msra.mxu0 0.0
        %1919 = vmatprep.subr.mxu0 0.0
        %1920 = vmatpush1.msra.mxu0 0.0
        %1921 = vmatprep.subr.mxu0 0.0
        %1922 = vmatpush1.msra.mxu0 0.0
        %1923 = vmatprep.subr.mxu0 0.0
        %1924 = vmatpush1.msra.mxu0 0.0
        %1925 = vmatprep.subr.mxu0 0.0
        %1926 = vmatpush1.msra.mxu0 0.0
        %1927 = vmatprep.subr.mxu0 0.0
        %1928 = vmatpush1.msra.mxu0 0.0
        %1929 = vmatprep.subr.mxu0 0.0
        %1930 = vmatpush1.msra.mxu0 0.0
        %1931 = vmatprep.subr.mxu0 0.0
        %1932 = vmatpush1.msra.mxu0 0.0
        %1933 = vmatprep.subr.mxu0 0.0
        %1934 = vmatpush1.msra.mxu0 0.0
        %1935 = vmatprep.subr.mxu0 0.0
        %1936 = vmatpush1.msra.mxu0 0.0
        %1937 = vmatprep.subr.mxu0 0.0
        %1938 = vmatpush1.msra.mxu0 0.0
        %1939 = vmatprep.subr.mxu0 0.0
        %1940 = vmatpush1.msra.mxu0 0.0
        %1941 = vmatprep.subr.mxu0 0.0
        %1942 = vmatpush1.msra.mxu0 0.0
        %1943 = vmatprep.subr.mxu0 0.0
        %1944 = vmatpush1.msra.mxu0 0.0
        %1945 = vmatprep.subr.mxu0 0.0
        %1946 = vmatpush1.msra.mxu0 0.0
        %1947 = vmatprep.subr.mxu0 0.0
        %1948 = vmatpush1.msra.mxu0 0.0
        %1949 = vmatprep.subr.mxu0 0.0
        %1950 = vmatpush1.msra.mxu0 0.0
        %1951 = vmatprep.subr.mxu0 0.0
        %1952 = vmatpush1.msra.mxu0 0.0
        %1953 = vmatprep.subr.mxu0 0.0
        %1954 = vmatpush1.msra.mxu0 0.0
        %1955 = vmatprep.subr.mxu0 0.0
        %1956 = vmatpush1.msra.mxu0 0.0
        %1957 = vmatprep.subr.mxu0 0.0
        %1958 = vmatpush1.msra.mxu0 0.0
        %1959 = vmatprep.subr.mxu0 0.0
        %1960 = vmatpush1.msra.mxu0 0.0
        %1961 = vmatprep.subr.mxu0 0.0
        %1962 = vmatpush1.msra.mxu0 0.0
        %1963 = vmatprep.subr.mxu0 0.0
        %1964 = vmatpush1.msra.mxu0 0.0
        %1965 = vmatprep.subr.mxu0 0.0
        %1966 = vmatpush1.msra.mxu0 0.0
        %1967 = vmatprep.subr.mxu0 0.0
        %1968 = vmatpush1.msra.mxu0 0.0
        %1969 = vmatprep.subr.mxu0 0.0
        %1970 = vmatpush1.msra.mxu0 0.0
        %1971 = vmatprep.subr.mxu0 0.0
        %1972 = vmatpush1.msra.mxu0 0.0
        %1973 = vmatprep.subr.mxu0 0.0
        %1974 = vmatpush1.msra.mxu0 0.0
        %1975 = vmatprep.subr.mxu0 0.0
        %1976 = vmatpush1.msra.mxu0 0.0
        %1977 = vmatprep.subr.mxu0 0.0
        %1978 = vmatpush1.msra.mxu0 0.0
        %1979 = vmatprep.mubr.f32.mxu0 0.0
        %1980 = vmatmul.mubr.f32.gmra.mrb[0].mxu0 %v1913
        %v1981 = vpop.f32.mrb[0].mxu0
        %v1982 = vadd.f32 0.0, %v1981
        %v1983 = vpop.f32.mrb[0].mxu0
        %1984 = vdwg.mxu0
        %v1985 = vcombine.low %v1763, %v1909
        %v1986 = vcombine.high %v1763, %v1909
        %v1988 = vunpack.c.l.s4 1983009808
        %v1989 = vunpack.c.0.s8 %v1988
        %v1990 = vlaneseq
        %v1991 = vshrl.u32 %v1990, 7
        %v1992 = vsub.s32 %v1989, %v1991
        %v1993 = vrot.slane %v1985, %v1992
        %v1995 = vunpack.c.l.s4 1983009808
        %v1996 = vunpack.c.0.s8 %v1995
        %v1997 = vlaneseq
        %v1998 = vshrl.u32 %v1997, 7
        %v1999 = vsub.s32 %v1996, %v1998
        %v2000 = vrot.slane %v1986, %v1999
        %v2001 = vcombine.low %v1836, %v1982
        %v2002 = vcombine.high %v1836, %v1982
        %v2004 = vunpack.c.l.s4 1983009808
        %v2005 = vunpack.c.0.s8 %v2004
        %v2006 = vlaneseq
        %v2007 = vshrl.u32 %v2006, 7
        %v2008 = vsub.s32 %v2005, %v2007
        %v2009 = vrot.slane %v2001, %v2008
        %v2011 = vunpack.c.l.s4 1983009808
        %v2012 = vunpack.c.0.s8 %v2011
        %v2013 = vlaneseq
        %v2014 = vshrl.u32 %v2013, 7
        %v2015 = vsub.s32 %v2012, %v2014
        %v2016 = vrot.slane %v2002, %v2015
        %v2017 = vcombine.low %v1993, %v2009
        %v2018 = vcombine.high %v1993, %v2009
        %v2020 = vunpack.c.l.s4 1934713408
        %v2021 = vunpack.c.0.s8 %v2020
        %v2022 = vlaneseq
        %v2023 = vshrl.u32 %v2022, 7
        %v2024 = vsub.s32 %v2021, %v2023
        %v2025 = vrot.slane %v2017, %v2024
        %v2027 = vunpack.c.l.s4 1934713408
        %v2028 = vunpack.c.0.s8 %v2027
        %v2029 = vlaneseq
        %v2030 = vshrl.u32 %v2029, 7
        %v2031 = vsub.s32 %v2028, %v2030
        %v2032 = vrot.slane %v2018, %v2031
        %v2033 = vcombine.low %v2000, %v2016
        %v2034 = vcombine.high %v2000, %v2016
        %v2036 = vunpack.c.l.s4 1934713408
        %v2037 = vunpack.c.0.s8 %v2036
        %v2038 = vlaneseq
        %v2039 = vshrl.u32 %v2038, 7
        %v2040 = vsub.s32 %v2037, %v2039
        %v2041 = vrot.slane %v2033, %v2040
        %v2043 = vunpack.c.l.s4 1934713408
        %v2044 = vunpack.c.0.s8 %v2043
        %v2045 = vlaneseq
        %v2046 = vshrl.u32 %v2045, 7
        %v2047 = vsub.s32 %v2044, %v2046
        %v2048 = vrot.slane %v2034, %v2047
        %v2049 = vcombine.high %v2025, 0.0
        %v2050 = vcombine.high %v2032, 0.0
        %v2051 = vcombine.high %v2041, 0.0
        %v2052 = vcombine.high %v2048, 0.0
        %v2053 = vcombine.low %v2025, %v2032
        %v2055 = vunpack.c.l.s4 1983009808
        %v2056 = vunpack.c.0.s8 %v2055
        %v2057 = vlaneseq
        %v2058 = vshrl.u32 %v2057, 7
        %v2059 = vsub.s32 %v2056, %v2058
        %v2060 = vrot.slane %v2053, %v2059
        %v2061 = vcombine.low %v2049, %v2050
        %v2063 = vunpack.c.l.s4 1983009808
        %v2064 = vunpack.c.0.s8 %v2063
        %v2065 = vlaneseq
        %v2066 = vshrl.u32 %v2065, 7
        %v2067 = vsub.s32 %v2064, %v2066
        %v2068 = vrot.slane %v2061, %v2067
        %v2069 = vcombine.low %v2041, %v2048
        %v2071 = vunpack.c.l.s4 1983009808
        %v2072 = vunpack.c.0.s8 %v2071
        %v2073 = vlaneseq
        %v2074 = vshrl.u32 %v2073, 7
        %v2075 = vsub.s32 %v2072, %v2074
        %v2076 = vrot.slane %v2069, %v2075
        %v2077 = vcombine.low %v2051, %v2052
        %v2079 = vunpack.c.l.s4 1983009808
        %v2080 = vunpack.c.0.s8 %v2079
        %v2081 = vlaneseq
        %v2082 = vshrl.u32 %v2081, 7
        %v2083 = vsub.s32 %v2080, %v2082
        %v2084 = vrot.slane %v2077, %v2083
        %v2085 = vcombine.low %v2060, %v2068
        %v2086 = vcombine.high %v2060, %v2068
        %v2088 = vunpack.c.l.s4 1934713408
        %v2089 = vunpack.c.0.s8 %v2088
        %v2090 = vlaneseq
        %v2091 = vshrl.u32 %v2090, 7
        %v2092 = vsub.s32 %v2089, %v2091
        %v2093 = vrot.slane %v2085, %v2092
        %v2095 = vunpack.c.l.s4 1934713408
        %v2096 = vunpack.c.0.s8 %v2095
        %v2097 = vlaneseq
        %v2098 = vshrl.u32 %v2097, 7
        %v2099 = vsub.s32 %v2096, %v2098
        %v2100 = vrot.slane %v2086, %v2099
        %v2101 = vcombine.low %v2076, %v2084
        %v2102 = vcombine.high %v2076, %v2084
        %v2104 = vunpack.c.l.s4 1934713408
        %v2105 = vunpack.c.0.s8 %v2104
        %v2106 = vlaneseq
        %v2107 = vshrl.u32 %v2106, 7
        %v2108 = vsub.s32 %v2105, %v2107
        %v2109 = vrot.slane %v2101, %v2108
        %v2111 = vunpack.c.l.s4 1934713408
        %v2112 = vunpack.c.0.s8 %v2111
        %v2113 = vlaneseq
        %v2114 = vshrl.u32 %v2113, 7
        %v2115 = vsub.s32 %v2112, %v2114
        %v2116 = vrot.slane %v2102, %v2115
        %v2117 = vcombine.low %v2093, %v2109
        %v2118 = vcombine.high %v2093, %v2109
        %v2119 = vcombine.low %v2100, %v2116
        %v2120 = vcombine.high %v2100, %v2116
        %2122 = vrot.lane.b32.xlu0 %v2118, 8
        %v2123 = vpop.permute.xlu0 %2122
        %2126 = vrot.lane.b32.xlu0 %v2119, 16
        %v2127 = vpop.permute.xlu0 %2126
        %2130 = vrot.lane.b32.xlu0 %v2120, 24
        %v2131 = vpop.permute.xlu0 %2130
        %v2133 = vsel %vm1340, %v2117, %v2123
        %vm2134 = vcmask 130048
        %v2135 = vsel %vm2134, %v2133, %v2127
        %vm2136 = vcmask 195584
        %v2137 = vsel %vm2136, %v2135, %v2131
        %v2138 = vld [vmem:[#allocation5] sm:$0xff]
        %v2139 = vld [vmem:[#allocation5 + $0x8] sm:$0xff]
        %v2140 = vld [vmem:[#allocation5 + $0x10] sm:$0xff]
        %v2141 = vld [vmem:[#allocation5 + $0x18] sm:$0xff]
        %v2142 = vld [vmem:[%s8] sm:$0x1]
        %v2144 = vlaneseq
        %v2145 = vshrl.u32 %v2144, 7
        %v2146 = vsub.s32 0, %v2145
        %v2147 = vrot.slane %v2142, %v2146
        %v2150 = vsel %vm662, %v2137, 0
        %2152 = vmatprep.subr.mxu0 0.0
        %2153 = vmatpush1.msra.mxu0 %v2138
        %2154 = vmatprep.subr.mxu0 0.0
        %2155 = vmatpush1.msra.mxu0 %v2139
        %2156 = vmatprep.subr.mxu0 0.0
        %2157 = vmatpush1.msra.mxu0 %v2140
        %2158 = vmatprep.subr.mxu0 0.0
        %2159 = vmatpush1.msra.mxu0 %v2141
        %2160 = vmatprep.subr.mxu0 0.0
        %2161 = vmatpush1.msra.mxu0 0.0
        %2162 = vmatprep.subr.mxu0 0.0
        %2163 = vmatpush1.msra.mxu0 0.0
        %2164 = vmatprep.subr.mxu0 0.0
        %2165 = vmatpush1.msra.mxu0 0.0
        %2166 = vmatprep.subr.mxu0 0.0
        %2167 = vmatpush1.msra.mxu0 0.0
        %2168 = vmatprep.subr.mxu0 0.0
        %2169 = vmatpush1.msra.mxu0 0.0
        %2170 = vmatprep.subr.mxu0 0.0
        %2171 = vmatpush1.msra.mxu0 0.0
        %2172 = vmatprep.subr.mxu0 0.0
        %2173 = vmatpush1.msra.mxu0 0.0
        %2174 = vmatprep.subr.mxu0 0.0
        %2175 = vmatpush1.msra.mxu0 0.0
        %2176 = vmatprep.subr.mxu0 0.0
        %2177 = vmatpush1.msra.mxu0 0.0
        %2178 = vmatprep.subr.mxu0 0.0
        %2179 = vmatpush1.msra.mxu0 0.0
        %2180 = vmatprep.subr.mxu0 0.0
        %2181 = vmatpush1.msra.mxu0 0.0
        %2182 = vmatprep.subr.mxu0 0.0
        %2183 = vmatpush1.msra.mxu0 0.0
        %2184 = vmatprep.subr.mxu0 0.0
        %2185 = vmatpush1.msra.mxu0 0.0
        %2186 = vmatprep.subr.mxu0 0.0
        %2187 = vmatpush1.msra.mxu0 0.0
        %2188 = vmatprep.subr.mxu0 0.0
        %2189 = vmatpush1.msra.mxu0 0.0
        %2190 = vmatprep.subr.mxu0 0.0
        %2191 = vmatpush1.msra.mxu0 0.0
        %2192 = vmatprep.subr.mxu0 0.0
        %2193 = vmatpush1.msra.mxu0 0.0
        %2194 = vmatprep.subr.mxu0 0.0
        %2195 = vmatpush1.msra.mxu0 0.0
        %2196 = vmatprep.subr.mxu0 0.0
        %2197 = vmatpush1.msra.mxu0 0.0
        %2198 = vmatprep.subr.mxu0 0.0
        %2199 = vmatpush1.msra.mxu0 0.0
        %2200 = vmatprep.subr.mxu0 0.0
        %2201 = vmatpush1.msra.mxu0 0.0
        %2202 = vmatprep.subr.mxu0 0.0
        %2203 = vmatpush1.msra.mxu0 0.0
        %2204 = vmatprep.subr.mxu0 0.0
        %2205 = vmatpush1.msra.mxu0 0.0
        %2206 = vmatprep.subr.mxu0 0.0
        %2207 = vmatpush1.msra.mxu0 0.0
        %2208 = vmatprep.subr.mxu0 0.0
        %2209 = vmatpush1.msra.mxu0 0.0
        %2210 = vmatprep.subr.mxu0 0.0
        %2211 = vmatpush1.msra.mxu0 0.0
        %2212 = vmatprep.subr.mxu0 0.0
        %2213 = vmatpush1.msra.mxu0 0.0
        %2214 = vmatprep.subr.mxu0 0.0
        %2215 = vmatpush1.msra.mxu0 0.0
        %2216 = vmatprep.mubr.f32.mxu0 0.0
        %2217 = vmatmul.mubr.f32.gmra.mrb[0].mxu0 %v2150
        %v2218 = vpop.f32.mrb[0].mxu0
        %v2219 = vadd.f32 %v2147, %v2218
        %v2220 = vpop.f32.mrb[0].mxu0
        %2221 = vdwg.mxu0
        %v2222 = vadd.f32 %v650, %v2219
        %v2223 = vld [vmem:[%s9] sm:$0x1]
        %v2224 = vld [vmem:[%s10] sm:$0x1]
        %v2225 = vsel %vm662, %v2222, 0.0
        %2226 = vadd.xlane.f32.xlu0 %v2225
        %v2227 = vpop.xlane.xlu0 %2226
        %v2228 = vrcp.pop 32.0
        %v2229 = vmul.f32 %v2227, %v2228
        %v2230 = vsub.f32 %v2222, %v2229
        %v2231 = vmul.f32 %v2230, %v2230
        %v2232 = vsel %vm662, %v2231, 0.0
        %2233 = vadd.xlane.f32.xlu0 %v2232
        %v2234 = vpop.xlane.xlu0 %2233
        %v2235 = vmul.f32 %v2234, %v2228
        %v2236 = vadd.f32 %v2235, 1e-05
        %v2237 = vrsqrt.pop %v2236
        %v2238 = vmul.f32 %v2230, %v2237
        %v2240 = vlaneseq
        %v2241 = vshrl.u32 %v2240, 7
        %v2242 = vsub.s32 0, %v2241
        %v2243 = vrot.slane %v2223, %v2242
        %v2245 = vmul.f32 %v2238, %v2243
        %v2247 = vlaneseq
        %v2248 = vshrl.u32 %v2247, 7
        %v2249 = vsub.s32 0, %v2248
        %v2250 = vrot.slane %v2224, %v2249
        %v2252 = vadd.f32 %v2245, %v2250
        %v2253 = vld [vmem:[#allocation7] sm:$0xff]
        %v2254 = vld [vmem:[#allocation7 + $0x8] sm:$0xff]
        %v2255 = vld [vmem:[#allocation7 + $0x10] sm:$0xff]
        %v2256 = vld [vmem:[#allocation7 + $0x18] sm:$0xff]
        %v2257 = vld [vmem:[%s12] sm:$0x1]
        %v2259 = vlaneseq
        %v2260 = vshrl.u32 %v2259, 7
        %v2261 = vsub.s32 0, %v2260
        %v2262 = vrot.slane %v2257, %v2261
        %v2265 = vsel %vm662, %v2252, 0
        %2267 = vmatprep.subr.mxu0 0.0
        %2268 = vmatpush1.msra.mxu0 %v2253
        %2269 = vmatprep.subr.mxu0 0.0
        %2270 = vmatpush1.msra.mxu0 %v2254
        %2271 = vmatprep.subr.mxu0 0.0
        %2272 = vmatpush1.msra.mxu0 %v2255
        %2273 = vmatprep.subr.mxu0 0.0
        %2274 = vmatpush1.msra.mxu0 %v2256
        %2275 = vmatprep.subr.mxu0 0.0
        %2276 = vmatpush1.msra.mxu0 0.0
        %2277 = vmatprep.subr.mxu0 0.0
        %2278 = vmatpush1.msra.mxu0 0.0
        %2279 = vmatprep.subr.mxu0 0.0
        %2280 = vmatpush1.msra.mxu0 0.0
        %2281 = vmatprep.subr.mxu0 0.0
        %2282 = vmatpush1.msra.mxu0 0.0
        %2283 = vmatprep.subr.mxu0 0.0
        %2284 = vmatpush1.msra.mxu0 0.0
        %2285 = vmatprep.subr.mxu0 0.0
        %2286 = vmatpush1.msra.mxu0 0.0
        %2287 = vmatprep.subr.mxu0 0.0
        %2288 = vmatpush1.msra.mxu0 0.0
        %2289 = vmatprep.subr.mxu0 0.0
        %2290 = vmatpush1.msra.mxu0 0.0
        %2291 = vmatprep.subr.mxu0 0.0
        %2292 = vmatpush1.msra.mxu0 0.0
        %2293 = vmatprep.subr.mxu0 0.0
        %2294 = vmatpush1.msra.mxu0 0.0
        %2295 = vmatprep.subr.mxu0 0.0
        %2296 = vmatpush1.msra.mxu0 0.0
        %2297 = vmatprep.subr.mxu0 0.0
        %2298 = vmatpush1.msra.mxu0 0.0
        %2299 = vmatprep.subr.mxu0 0.0
        %2300 = vmatpush1.msra.mxu0 0.0
        %2301 = vmatprep.subr.mxu0 0.0
        %2302 = vmatpush1.msra.mxu0 0.0
        %2303 = vmatprep.subr.mxu0 0.0
        %2304 = vmatpush1.msra.mxu0 0.0
        %2305 = vmatprep.subr.mxu0 0.0
        %2306 = vmatpush1.msra.mxu0 0.0
        %2307 = vmatprep.subr.mxu0 0.0
        %2308 = vmatpush1.msra.mxu0 0.0
        %2309 = vmatprep.subr.mxu0 0.0
        %2310 = vmatpush1.msra.mxu0 0.0
        %2311 = vmatprep.subr.mxu0 0.0
        %2312 = vmatpush1.msra.mxu0 0.0
        %2313 = vmatprep.subr.mxu0 0.0
        %2314 = vmatpush1.msra.mxu0 0.0
        %2315 = vmatprep.subr.mxu0 0.0
        %2316 = vmatpush1.msra.mxu0 0.0
        %2317 = vmatprep.subr.mxu0 0.0
        %2318 = vmatpush1.msra.mxu0 0.0
        %2319 = vmatprep.subr.mxu0 0.0
        %2320 = vmatpush1.msra.mxu0 0.0
        %2321 = vmatprep.subr.mxu0 0.0
        %2322 = vmatpush1.msra.mxu0 0.0
        %2323 = vmatprep.subr.mxu0 0.0
        %2324 = vmatpush1.msra.mxu0 0.0
        %2325 = vmatprep.subr.mxu0 0.0
        %2326 = vmatpush1.msra.mxu0 0.0
        %2327 = vmatprep.subr.mxu0 0.0
        %2328 = vmatpush1.msra.mxu0 0.0
        %2329 = vmatprep.subr.mxu0 0.0
        %2330 = vmatpush1.msra.mxu0 0.0
        %2331 = vmatprep.mubr.f32.mxu0 0.0
        %2332 = vmatmul.mubr.f32.gmra.mrb[0].mxu0 %v2265
        %v2333 = vpop.f32.mrb[0].mxu0
        %v2334 = vadd.f32 %v2262, %v2333
        %v2335 = vpop.f32.mrb[0].mxu0
        %2336 = vdwg.mxu0
        %v2337 = vxor.u32 %v2334, 2147483648
        %v2338 = vmul.f32 %v2337, 1.442695
        %v2339 = vpow.pop %v2338
        %v2340 = vadd.f32 %v2339, 1.0
        %v2341 = vrcp.pop %v2340
        %v2342 = vmul.f32 1.0, %v2341
        %v2343 = vmul.f32 %v2334, %v2342
        %v2344 = vld [vmem:[%s13] sm:$0xff]
        %v2345 = vld [vmem:[%s13 + $0x8] sm:$0xff]
        %v2346 = vld [vmem:[%s13 + $0x10] sm:$0xff]
        %v2347 = vld [vmem:[%s13 + $0x18] sm:$0xff]
        %v2348 = vld [vmem:[%s13 + $0x20] sm:$0xff]
        %v2349 = vld [vmem:[%s13 + $0x28] sm:$0xff]
        %v2350 = vld [vmem:[%s13 + $0x30] sm:$0xff]
        %v2351 = vld [vmem:[%s13 + $0x38] sm:$0xff]
        %v2352 = vld [vmem:[%s14] sm:$0x1]
        %v2354 = vlaneseq
        %v2355 = vshrl.u32 %v2354, 7
        %v2356 = vsub.s32 0, %v2355
        %v2357 = vrot.slane %v2352, %v2356
        %vm2359 = vcmask 523264
        %v2361 = vsel %vm2359, %v2343, 0
        %2363 = vmatprep.subr.mxu0 0.0
        %2364 = vmatpush1.msra.mxu0 %v2344
        %2365 = vmatprep.subr.mxu0 0.0
        %2366 = vmatpush1.msra.mxu0 %v2345
        %2367 = vmatprep.subr.mxu0 0.0
        %2368 = vmatpush1.msra.mxu0 %v2346
        %2369 = vmatprep.subr.mxu0 0.0
        %2370 = vmatpush1.msra.mxu0 %v2347
        %2371 = vmatprep.subr.mxu0 0.0
        %2372 = vmatpush1.msra.mxu0 %v2348
        %2373 = vmatprep.subr.mxu0 0.0
        %2374 = vmatpush1.msra.mxu0 %v2349
        %2375 = vmatprep.subr.mxu0 0.0
        %2376 = vmatpush1.msra.mxu0 %v2350
        %2377 = vmatprep.subr.mxu0 0.0
        %2378 = vmatpush1.msra.mxu0 %v2351
        %2379 = vmatprep.subr.mxu0 0.0
        %2380 = vmatpush1.msra.mxu0 0.0
        %2381 = vmatprep.subr.mxu0 0.0
        %2382 = vmatpush1.msra.mxu0 0.0
        %2383 = vmatprep.subr.mxu0 0.0
        %2384 = vmatpush1.msra.mxu0 0.0
        %2385 = vmatprep.subr.mxu0 0.0
        %2386 = vmatpush1.msra.mxu0 0.0
        %2387 = vmatprep.subr.mxu0 0.0
        %2388 = vmatpush1.msra.mxu0 0.0
        %2389 = vmatprep.subr.mxu0 0.0
        %2390 = vmatpush1.msra.mxu0 0.0
        %2391 = vmatprep.subr.mxu0 0.0
        %2392 = vmatpush1.msra.mxu0 0.0
        %2393 = vmatprep.subr.mxu0 0.0
        %2394 = vmatpush1.msra.mxu0 0.0
        %2395 = vmatprep.subr.mxu0 0.0
        %2396 = vmatpush1.msra.mxu0 0.0
        %2397 = vmatprep.subr.mxu0 0.0
        %2398 = vmatpush1.msra.mxu0 0.0
        %2399 = vmatprep.subr.mxu0 0.0
        %2400 = vmatpush1.msra.mxu0 0.0
        %2401 = vmatprep.subr.mxu0 0.0
        %2402 = vmatpush1.msra.mxu0 0.0
        %2403 = vmatprep.subr.mxu0 0.0
        %2404 = vmatpush1.msra.mxu0 0.0
        %2405 = vmatprep.subr.mxu0 0.0
        %2406 = vmatpush1.msra.mxu0 0.0
        %2407 = vmatprep.subr.mxu0 0.0
        %2408 = vmatpush1.msra.mxu0 0.0
        %2409 = vmatprep.subr.mxu0 0.0
        %2410 = vmatpush1.msra.mxu0 0.0
        %2411 = vmatprep.subr.mxu0 0.0
        %2412 = vmatpush1.msra.mxu0 0.0
        %2413 = vmatprep.subr.mxu0 0.0
        %2414 = vmatpush1.msra.mxu0 0.0
        %2415 = vmatprep.subr.mxu0 0.0
        %2416 = vmatpush1.msra.mxu0 0.0
        %2417 = vmatprep.subr.mxu0 0.0
        %2418 = vmatpush1.msra.mxu0 0.0
        %2419 = vmatprep.subr.mxu0 0.0
        %2420 = vmatpush1.msra.mxu0 0.0
        %2421 = vmatprep.subr.mxu0 0.0
        %2422 = vmatpush1.msra.mxu0 0.0
        %2423 = vmatprep.subr.mxu0 0.0
        %2424 = vmatpush1.msra.mxu0 0.0
        %2425 = vmatprep.subr.mxu0 0.0
        %2426 = vmatpush1.msra.mxu0 0.0
        %2427 = vmatprep.mubr.f32.mxu0 0.0
        %2428 = vmatmul.mubr.f32.gmra.mrb[0].mxu0 %v2361
        %v2429 = vpop.f32.mrb[0].mxu0
        %v2430 = vadd.f32 %v2357, %v2429
        %v2431 = vpop.f32.mrb[0].mxu0
        %2432 = vdwg.mxu0
        %v2433 = vadd.f32 %v2252, %v2430
        %v2434 = vld [vmem:[%s15] sm:$0x1]
        %v2435 = vld [vmem:[%s16] sm:$0x1]
        %v2436 = vsel %vm662, %v2433, 0.0
        %2437 = vadd.xlane.f32.xlu0 %v2436
        %v2438 = vpop.xlane.xlu0 %2437
        %v2439 = vmul.f32 %v2438, %v2228
        %v2440 = vsub.f32 %v2433, %v2439
        %v2441 = vmul.f32 %v2440, %v2440
        %v2442 = vsel %vm662, %v2441, 0.0
        %2443 = vadd.xlane.f32.xlu0 %v2442
        %v2444 = vpop.xlane.xlu0 %2443
        %v2445 = vmul.f32 %v2444, %v2228
        %v2446 = vadd.f32 %v2445, 1e-05
        %v2447 = vrsqrt.pop %v2446
        %v2448 = vmul.f32 %v2440, %v2447
        %v2450 = vlaneseq
        %v2451 = vshrl.u32 %v2450, 7
        %v2452 = vsub.s32 0, %v2451
        %v2453 = vrot.slane %v2434, %v2452
        %v2455 = vmul.f32 %v2448, %v2453
        %v2457 = vlaneseq
        %v2458 = vshrl.u32 %v2457, 7
        %v2459 = vsub.s32 0, %v2458
        %v2460 = vrot.slane %v2435, %v2459
        %v2462 = vadd.f32 %v2455, %v2460
        %2463 = vst.msk [vmem:[%s639] sm:$0xff] %vm662, %v2462
        %s2464 = sand.u32 %s424, 1
        %s2465 = scalar_lea.sflag [#allocation4], %s2464
        %s2466 = sand.u32 %s424, 1
        %s2467 = smul.addr %s2466, 8
        %s2468 = scalar_lea.vmem [#allocation8], %s2467
        %s2469 = sand.u32 %s452, 1
        %s2470 = scalar_lea.sflag [#allocation10], %s2469
        %s2471 = sand.u32 %s452, 1
        %s2472 = smul.addr %s2471, 32
        %s2473 = scalar_lea.vmem [#allocation9], %s2472
        // Predicated region
        $region101: #{tpu_custom_call.1} parent=87 // pred_check
          %p2474 = pneg %p434
        $region102: #{tpu_custom_call.1} parent=87 // pred_check_branch
          %2476 = sbr.rel (%p2474) target = $region104
        $region103: #{tpu_custom_call.1} parent=87 // pred_region
          %s2478 = ssub.s32 128, 128
          %2479 = vsyncadd %s2465, %s2478
          %s2480 = sadd.s32 %s45, %s44
          %s2481 = smul.addr %s2480, 128
          %s2482 = scalar_lea.hbm %s17, %s2481
          %s2484 = sshll.u32 %s2468, 4
          %s2485 = int_to_ptr.vmem [resolvable:$true] %s2484
          %2487 = dma.vmem_to_hbm [thread:$0]  %s2485, 128, %s2482, %s2465
        $region104: #{tpu_custom_call.1} parent=87 // pred_fallthru
          _
        // Predicated region
        $region105: #{tpu_custom_call.1} parent=87 // pred_check
          %p2488 = pneg %p462
        $region106: #{tpu_custom_call.1} parent=87 // pred_check_branch
          %2490 = sbr.rel (%p2488) target = $region108
        $region107: #{tpu_custom_call.1} parent=87 // pred_region
          %s2492 = ssub.s32 512, 512
          %2493 = vsyncadd %s2470, %s2492
          %s2494 = smul.addr %s44, 4
          %s2495 = sadd.s32 %s45, %s2494
          %s2496 = smul.addr %s2495, 128
          %s2497 = scalar_lea.hbm %s18, %s2496
          %s2498 = sshll.u32 %s2473, 4
          %s2499 = int_to_ptr.vmem [resolvable:$true] %s2498
          %2504 = dma.vmem_to_hbm [thread:$0]  %s2499, 512, %s2497, %s2470, 128, 128, 8
        $region108: #{tpu_custom_call.1} parent=87 // pred_fallthru
          _
      $region88: #{tpu_custom_call.1} parent=5 // pred_fallthru
        _
      %p2505 = scmp.le.s32.totalorder 2, %s35
      // Predicated region
      $region109: #{tpu_custom_call.1} parent=5 // pred_check
        %p2506 = pneg %p2505
      $region110: #{tpu_custom_call.1} parent=5 // pred_check_branch
        %2508 = sbr.rel (%p2506) target = $region112
      $region111: #{tpu_custom_call.1} parent=5 // pred_region
        %s2509 = ssub.s32 %s35, 2
        // Predicated region
        $region113: #{tpu_custom_call.1} parent=111 // pred_check
          %p2510 = pneg %p440
        $region114: #{tpu_custom_call.1} parent=111 // pred_check_branch
          %2512 = sbr.rel (%p2510) target = $region116
        $region115: #{tpu_custom_call.1} parent=111 // pred_region
          %s2513 = sand.u32 %s425, 1
          %s2514 = scalar_lea.sflag [#allocation4], %s2513
          %s2515 = sand.u32 %s425, 1
          %s2516 = smul.addr %s2515, 8
          %s2517 = scalar_lea.vmem [#allocation8], %s2516
          %2518 = dma.done %s2514, 128
        $region116: #{tpu_custom_call.1} parent=111 // pred_fallthru
          _
        // Predicated region
        $region117: #{tpu_custom_call.1} parent=111 // pred_check
          %p2519 = pneg %p468
        $region118: #{tpu_custom_call.1} parent=111 // pred_check_branch
          %2521 = sbr.rel (%p2519) target = $region120
        $region119: #{tpu_custom_call.1} parent=111 // pred_region
          %s2522 = sand.u32 %s453, 1
          %s2523 = scalar_lea.sflag [#allocation10], %s2522
          %s2524 = sand.u32 %s453, 1
          %s2525 = smul.addr %s2524, 32
          %s2526 = scalar_lea.vmem [#allocation9], %s2525
          %2527 = dma.done %s2523, 512
        $region120: #{tpu_custom_call.1} parent=111 // pred_fallthru
          _
      $region112: #{tpu_custom_call.1} parent=5 // pred_fallthru
        _
    $region6: #{tpu_custom_call.1} parent=1 // loop_footer
      %s39 = sadd.s32 1, %s35
    $region7: #{tpu_custom_call.1} parent=1 // loop_footer_branch
      %34 = sbr.rel target = $region3
    $region8: #{tpu_custom_call.1} parent=1 // loop_exit
      _
    %2528 = vsyncpa [#allocation3], 1
    %s2529 = scalar_lea.sflag [#allocation3], 1
    %2530 = vsyncpa %s2529, 1
    %2531 = vsyncpa [#allocation6], 1
    %2532 = vsyncpa [#allocation4], 1
    %s2533 = scalar_lea.sflag [#allocation4], 1
    %2534 = vsyncpa %s2533, 1
    %2535 = vsyncpa [#allocation10], 1
    %s2536 = scalar_lea.sflag [#allocation10], 1
    %2537 = vsyncpa %s2536, 1

</llo_original>
